<compile_context>
chip_gen: v5e
topology: v5e:2x2
jax: 0.10.0
libtpu: 0.0.40
codegen_flags: <defaults>
</compile_context>

<pallas_src>
import jax
import jax.numpy as jnp
from jax.experimental import pallas as pl
from jax.experimental.pallas import tpu as pltpu


# ----------------------------------------------------------------------------
# Kernel
# ----------------------------------------------------------------------------
def _linear_block_kernel(x_ref, w_ref, b_ref, o_ref):
    # x_ref: (TB, VT, S), w_ref: (VT, S, P), b_ref: (1, VT, P) f32,
    # o_ref: (TB, VT, P).
    # One batched MXU contraction over S with VT as the batch dim, f32
    # accumulation, f32 bias add, and a single full-tile store.
    acc = jnp.einsum(
        "bvs,vsp->bvp",
        x_ref[...],
        w_ref[...],
        preferred_element_type=jnp.float32,
    )
    acc = acc + b_ref[...]                  # (1, VT, P) broadcasts over TB
    o_ref[...] = acc.astype(o_ref.dtype)    # single lane-dense store


# ----------------------------------------------------------------------------
# Tiling / VMEM budgeting
# ----------------------------------------------------------------------------
def _vmem_capacity_bytes():
    """Physical VMEM of the current chip; conservative fallback if unknown."""
    try:
        info = pltpu.get_tpu_info()
        cap = getattr(info, "vmem_capacity_bytes", None)
        if cap:
            return int(cap)
    except Exception:
        pass
    return 64 * 1024 * 1024  # conservative (v7x has the smallest VMEM: 64 MiB)


def _candidate_vts(V):
    """Valid variate-block sizes: multiples of 8 dividing V, plus V itself
    (full-extent blocks are always legal on the second-minor dim)."""
    cands = {V}
    for vt in range(8, V, 8):
        if V % vt == 0:
            cands.add(vt)
    return sorted(cands, reverse=True)


def _double_buffered_bytes(B, VT, S, P, in_item, out_item):
    x_b = B * VT * S * in_item
    w_b = VT * S * P * in_item
    b_b = VT * P * 4            # bias kept in f32
    o_b = B * VT * P * out_item
    return 2 * (x_b + w_b + b_b + o_b)   # BlockSpec double-buffers every operand


def _pick_tiles(B, V, S, P, in_item, out_item, block_budget):
    """Largest VT fitting the VMEM budget, preferring >=2 variate blocks so the
    parallel axis can be sharded across v7x's two TensorCores.  If V cannot be
    split validly, split B instead to keep >=2 parallel grid steps."""
    cands = _candidate_vts(V)
    fitting = [vt for vt in cands
               if _double_buffered_bytes(B, vt, S, P, in_item, out_item)
               <= block_budget]
    if not fitting:
        fitting = [cands[-1]]   # smallest valid block; unavoidable for tiny V
    multi = [vt for vt in fitting if V // vt >= 2]
    VT = multi[0] if multi else fitting[0]
    num_v = V // VT

    if num_v == 1 and B >= 2 and B % 2 == 0:
        TB, num_b = B // 2, 2    # second parallel axis feeds the second core
    else:
        TB, num_b = B, 1
    return VT, num_v, TB, num_b


# ----------------------------------------------------------------------------
# Parameter prep (one-time, at init — NOT in the per-call forward path)
# ----------------------------------------------------------------------------
def prepare_linear_block_params(weights, biases, *, compute_dtype=None):
    """weights: [V, P, S] (nn.Linear, out x in), biases: [V, P].
    Returns (w_vsp [V, S, P] in compute_dtype, b_1vp [1, V, P] f32)."""
    V, P, S = weights.shape
    w_vsp = jnp.transpose(weights, (0, 2, 1))            # [V, S, P] — MXU [K, N]
    if compute_dtype is not None:
        w_vsp = w_vsp.astype(compute_dtype)
    b_1vp = biases.reshape(1, V, P).astype(jnp.float32)  # bias add stays f32
    return w_vsp, b_1vp


# ----------------------------------------------------------------------------
# Forward
# ----------------------------------------------------------------------------
def linear_block_forward(x, w_vsp, b_1vp, *, compute_dtype=None):
    """Per-variate linear projection (forward of LinearBlock).

    x:      [B, V, S]  (same layout as the PyTorch module input)
    w_vsp:  [V, S, P]  (from prepare_linear_block_params)
    b_1vp:  [1, V, P]  (f32, from prepare_linear_block_params)
    returns [B, V, P]  in x's original dtype.
    """
    B, V, S = x.shape
    Vw, Sw, P = w_vsp.shape
    assert Vw == V and Sw == S
    out_dtype = x.dtype

    if compute_dtype is not None and x.dtype != compute_dtype:
        x = x.astype(compute_dtype)
    assert x.dtype == w_vsp.dtype, "x / weight compute dtypes must match"

    in_item = jnp.dtype(x.dtype).itemsize
    out_item = jnp.dtype(out_dtype).itemsize

    # Per-generation VMEM budget: raise the scoped limit toward the physical
    # capacity (minus headroom for compiler internals) and size blocks at ~85%
    # of that.  v5e/v6e (128 MiB) -> ~112 MiB limit; v7x (64 MiB) -> ~52 MiB.
    cap = _vmem_capacity_bytes()
    vmem_limit = max(32 << 20, int(min(cap - (12 << 20), 112 << 20)))
    block_budget = int(vmem_limit * 0.85)

    VT, num_v_blocks, TB, num_b_blocks = _pick_tiles(
        B, V, S, P, in_item, out_item, block_budget)

    cost = pl.CostEstimate(
        flops=2 * B * V * S * P,
        transcendentals=0,
        bytes_accessed=int(
            x.size * in_item
            + w_vsp.size * jnp.dtype(w_vsp.dtype).itemsize
            + b_1vp.size * jnp.dtype(b_1vp.dtype).itemsize
            + B * V * P * out_item
        ),
    )

    out = pl.pallas_call(
        _linear_block_kernel,
        out_shape=jax.ShapeDtypeStruct((B, V, P), out_dtype),
        grid_spec=pltpu.PrefetchScalarGridSpec(
            num_scalar_prefetch=0,
            grid=(num_b_blocks, num_v_blocks),
            in_specs=[
                pl.BlockSpec((TB, VT, S), lambda bi, vi: (bi, vi, 0)),  # x
                pl.BlockSpec((VT, S, P), lambda bi, vi: (vi, 0, 0)),    # W^T blocks
                pl.BlockSpec((1, VT, P), lambda bi, vi: (0, vi, 0)),    # bias (f32)
            ],
            out_specs=pl.BlockSpec((TB, VT, P), lambda bi, vi: (bi, vi, 0)),
        ),
        compiler_params=pltpu.CompilerParams(
            dimension_semantics=("parallel", "parallel"),
            vmem_limit_bytes=vmem_limit,
        ),
        cost_estimate=cost,
    )(x, w_vsp, b_1vp)

    return out  # [B, V, P] — already final layout, no wrapper transpose


# ----------------------------------------------------------------------------
# Reference & test
# ----------------------------------------------------------------------------
def _reference(x, weights, biases):
    # out[b, v, p] = sum_s x[b, v, s] * W[v, p, s] + b[v, p]
    return (jnp.einsum("bvs,vps->bvp", x.astype(jnp.float32),
                       weights.astype(jnp.float32))
            + biases.astype(jnp.float32)[None, :, :])


if __name__ == "__main__":
    key = jax.random.PRNGKey(0)
    k1, k2, k3, k4, k5, k6 = jax.random.split(key, 6)

    def make_inputs(B, V, S, P, kx, kw, kb):
        x = jax.random.normal(kx, (B, V, S), dtype=jnp.float32)
        bound = 1.0 / (S ** 0.5)
        weights = jax.random.uniform(kw, (V, P, S), minval=-bound, maxval=bound,
                                     dtype=jnp.float32)
        biases = jax.random.uniform(kb, (V, P), minval=-bound, maxval=bound,
                                    dtype=jnp.float32)
        return x, weights, biases

    # Case 1: V large enough to block along variates (f32, tight tolerance).
    B, V, S, P = 2, 16, 16, 12
    x, w, b = make_inputs(B, V, S, P, k1, k2, k3)
    w_vsp, b_1vp = prepare_linear_block_params(w, b)
    out = jax.block_until_ready(linear_block_forward(x, w_vsp, b_1vp))
    ref = _reference(x, w, b)
    assert out.shape == (B, V, P) and out.dtype == x.dtype
    assert jnp.allclose(out, ref, atol=1e-5, rtol=1e-5)

    # Case 2: tiny V (single variate block -> the batch axis supplies the 2nd
    # parallel grid step), with bf16 operand compression + f32 accumulation.
    B, V, S, P = 2, 4, 8, 12
    x, w, b = make_inputs(B, V, S, P, k4, k5, k6)
    w_vsp, b_1vp = prepare_linear_block_params(w, b, compute_dtype=jnp.bfloat16)
    out = jax.block_until_ready(
        linear_block_forward(x, w_vsp, b_1vp, compute_dtype=jnp.bfloat16))
    ref = _reference(x, w, b)
    assert out.shape == (B, V, P) and out.dtype == x.dtype
    assert jnp.allclose(out, ref, atol=5e-2, rtol=5e-2)

    print("KERNEL_OK")
</pallas_src>

<mosaic_0001>
module attributes {stable_mosaic.version = 11 : i64} {
  func.func @_linear_block_kernel(%arg0: i32, %arg1: i32, %arg2: memref<2x8x16xf32, #tpu.memory_space<vmem>>, %arg3: memref<8x16x12xf32, #tpu.memory_space<vmem>>, %arg4: memref<1x8x12xf32, #tpu.memory_space<vmem>>, %arg5: memref<2x8x12xf32, #tpu.memory_space<vmem>>) attributes {dimension_semantics = [#tpu.dimension_semantics<parallel>, #tpu.dimension_semantics<parallel>], iteration_bounds = array<i64: 1, 2>, scalar_prefetch = 0 : i64, scratch_operands = 0 : i64, tpu.core_type = #tpu.core_type<tc>, window_params = [{transform_indices = @transform_0, window_bounds = array<i64: 2, 8, 16>}, {transform_indices = @transform_1, window_bounds = array<i64: 8, 16, 12>}, {transform_indices = @transform_2, window_bounds = array<i64: 1, 8, 12>}, {transform_indices = @transform_3, window_bounds = array<i64: 2, 8, 12>}]} {
    %c0 = arith.constant 0 : index
    %c0_0 = arith.constant 0 : index
    %c0_1 = arith.constant 0 : index
    %0 = vector.load %arg2[%c0, %c0_0, %c0_1] : memref<2x8x16xf32, #tpu.memory_space<vmem>>, vector<2x8x16xf32>
    %c0_2 = arith.constant 0 : index
    %c0_3 = arith.constant 0 : index
    %c0_4 = arith.constant 0 : index
    %1 = vector.load %arg3[%c0_2, %c0_3, %c0_4] : memref<8x16x12xf32, #tpu.memory_space<vmem>>, vector<8x16x12xf32>
    "tpu.trace_start"() <{level = 10 : i32, message = "bvs,vsp->bvp"}> : () -> ()
    %cst = arith.constant dense<0.000000e+00> : vector<8x12x2xf32>
    %2 = tpu.matmul %1, %0, %cst {dimension_numbers = #tpu.dot_dimension_numbers<[1], [2], [2], [0], [0, 0, 0, 2, 1, 0], [0], [1]>} : vector<8x16x12xf32>, vector<2x8x16xf32>, vector<8x12x2xf32> -> vector<8x12x2xf32>
    %3 = tpu.transpose %2, [2, 0, 1] : vector<8x12x2xf32> -> vector<2x8x12xf32>
    "tpu.trace_stop"() : () -> ()
    %c0_5 = arith.constant 0 : index
    %c0_6 = arith.constant 0 : index
    %c0_7 = arith.constant 0 : index
    %4 = vector.load %arg4[%c0_5, %c0_6, %c0_7] : memref<1x8x12xf32, #tpu.memory_space<vmem>>, vector<1x8x12xf32>
    %5 = vector.broadcast %4 : vector<1x8x12xf32> to vector<2x8x12xf32>
    %6 = arith.addf %3, %5 : vector<2x8x12xf32>
    %c0_8 = arith.constant 0 : index
    %c0_9 = arith.constant 0 : index
    %c0_10 = arith.constant 0 : index
    %7 = vector.load %arg5[%c0_8, %c0_9, %c0_10] : memref<2x8x12xf32, #tpu.memory_space<vmem>>, vector<2x8x12xf32>
    tpu.vector_store %arg5[%c0_8, %c0_9, %c0_10], %6 {strides = array<i32>} : memref<2x8x12xf32, #tpu.memory_space<vmem>>, vector<2x8x12xf32>,
    return
  }
  func.func @transform_0(%arg0: i32, %arg1: i32) -> (i32, i32, i32) {
    %c0_i32 = arith.constant 0 : i32
    %c0_i32_0 = arith.constant 0 : i32
    return %arg0, %arg1, %c0_i32 : i32, i32, i32
  }
  func.func @transform_1(%arg0: i32, %arg1: i32) -> (i32, i32, i32) {
    %c0_i32 = arith.constant 0 : i32
    %c0_i32_0 = arith.constant 0 : i32
    %c0_i32_1 = arith.constant 0 : i32
    return %arg1, %c0_i32, %c0_i32_0 : i32, i32, i32
  }
  func.func @transform_2(%arg0: i32, %arg1: i32) -> (i32, i32, i32) {
    %c0_i32 = arith.constant 0 : i32
    %c0_i32_0 = arith.constant 0 : i32
    %c0_i32_1 = arith.constant 0 : i32
    return %c0_i32, %arg1, %c0_i32_0 : i32, i32, i32
  }
  func.func @transform_3(%arg0: i32, %arg1: i32) -> (i32, i32, i32) {
    %c0_i32 = arith.constant 0 : i32
    %c0_i32_0 = arith.constant 0 : i32
    return %arg0, %arg1, %c0_i32 : i32, i32, i32
  }
}

</mosaic_0001>

<llo_original>
// kernel: tpu_custom_call.1
$region0: #{tpu_custom_call.1}
  #allocation0 [shape = 'u32[]', space=smem, size = 0x4, offset = 0x4, fixed_abs, tag = 'smem constant byte address 0x4 - core index']
  #allocation1 [shape = 'u32[72,128]{1,0:T(1,128)}', space=vmem, size = 0x9000, scoped, tag = 'internal scratch']
  %s0 = inlined_call_operand.vmem [shape: f32[2,16,16], index: 0, kind: input, shape index: {}]
  %s1 = inlined_call_operand.vmem [shape: f32[16,16,12], index: 1, kind: input, shape index: {}]
  %s2 = inlined_call_operand.vmem [shape: f32[1,16,12], index: 2, kind: input, shape index: {}]
  %s3 = inlined_call_operand.vmem [shape: f32[2,16,12], index: 3, kind: output, shape index: {}]
  %s4 = sld [smem:[#allocation0]]
  $region117: #{tpu_custom_call.1} parent=0
    _
  %s6 = ssub.s32 1, %s4
  %s7 = scalar_select 0, %s6, %s4
  $region1: #{tpu_custom_call.1} parent=0
    #allocation2 [shape = 'u8[16384]{0}', space=vmem, size = 0x4000, scoped, tag = 'input window, operand 0']
    #allocation3 [shape = 'u8[16384]{0}', space=vmem, size = 0x4000, scoped, tag = 'output window, operand 0']
    loop: start=0, step=1, limit=4
    $region2: #{tpu_custom_call.1} parent=1 // loop_pre_header
      _
    $region3: #{tpu_custom_call.1} parent=1 // loop_header
      %s9 = sphi 0, %s13
      %p10 = scmp.ge.s32.totalorder %s9, 4
      %s16 = sphi 0, %s28
      %s17 = sphi 0, %s24
      %s18 = sphi 0, %s16
      %s19 = sphi 0, %s17
      %s20 = sphi 0, %s18
      %s21 = sphi 0, %s19
      %s33 = sphi 0, %s35
      %s36 = sphi 0, %s33
      %s37 = sphi 0, %s36
      %s53 = sphi 0, %s37
      %s59 = sphi 0, %s61
      %s62 = sphi 0, %s59
      %s63 = sphi 0, %s62
      %s79 = sphi 0, %s63
      %s85 = sphi 0, %s87
      %s88 = sphi 0, %s85
      %s89 = sphi 0, %s88
      %s105 = sphi 0, %s89
      %s113 = sphi 0, %s115
      %s116 = sphi 0, %s113
      %s117 = sphi 0, %s116
      %s133 = sphi 0, %s117
    $region4: #{tpu_custom_call.1} parent=1 // loop_header_branch
      %12 = sbr.rel (%p10) target = $region8
    $region5: #{tpu_custom_call.1} parent=1 // loop_body
      %s14 = ssub.s32 %s9, 1
      %s15 = ssub.s32 %s9, 2
      %s22 = sadd.s32 1, %s17
      %p23 = scmp.ge.s32.totalorder %s22, 2
      %s24 = scalar_select %p23, 0, %s22
      %s25 = sadd.s32 1, %s16
      %s26 = scalar_select %p23, %s25, %s16
      %p27 = scmp.ge.s32.totalorder %s26, 1
      %s28 = scalar_select %p27, 0, %s26
      %s29 = ssub.s32 %s16, %s28
      %s30 = ssub.s32 %s17, %s24
      %s31 = sor.u32 %s29, %s30
      %p32 = scmp.eq.s32.totalorder %s31, 0
      %s34 = sadd.s32 %s33, 1
      %s35 = scalar_select %p32, %s33, %s34
      %p38 = pneg %p32
      %p39 = scmp.eq.s32.totalorder %s9, 1
      %p40 = por %p38, %p39
      %p41 = scmp.ne.s32.totalorder %s33, %s36
      %p42 = scmp.eq.s32.totalorder %s9, 0
      %p43 = por %p41, %p42
      %p44 = scmp.ne.s32.totalorder %s33, %s36
      %p45 = scmp.eq.s32.totalorder %s14, 1
      %p46 = por %p44, %p45
      %p47 = scmp.ne.s32.totalorder %s36, %s37
      %p48 = scmp.eq.s32.totalorder %s14, 0
      %p49 = por %p47, %p48
      %p50 = scmp.ne.s32.totalorder %s36, %s37
      %p51 = scmp.eq.s32.totalorder %s15, 1
      %p52 = por %p50, %p51
      %p54 = scmp.ne.s32.totalorder %s37, %s53
      %p55 = scmp.eq.s32.totalorder %s15, 0
      %p56 = por %p54, %p55
      %s57 = ssub.s32 %s17, %s24
      %p58 = scmp.eq.s32.totalorder %s57, 0
      %s60 = sadd.s32 %s59, 1
      %s61 = scalar_select %p58, %s59, %s60
      %p64 = pneg %p58
      %p65 = scmp.eq.s32.totalorder %s9, 1
      %p66 = por %p64, %p65
      %p67 = scmp.ne.s32.totalorder %s59, %s62
      %p68 = scmp.eq.s32.totalorder %s9, 0
      %p69 = por %p67, %p68
      %p70 = scmp.ne.s32.totalorder %s59, %s62
      %p71 = scmp.eq.s32.totalorder %s14, 1
      %p72 = por %p70, %p71
      %p73 = scmp.ne.s32.totalorder %s62, %s63
      %p74 = scmp.eq.s32.totalorder %s14, 0
      %p75 = por %p73, %p74
      %p76 = scmp.ne.s32.totalorder %s62, %s63
      %p77 = scmp.eq.s32.totalorder %s15, 1
      %p78 = por %p76, %p77
      %p80 = scmp.ne.s32.totalorder %s63, %s79
      %p81 = scmp.eq.s32.totalorder %s15, 0
      %p82 = por %p80, %p81
      %s83 = ssub.s32 %s17, %s24
      %p84 = scmp.eq.s32.totalorder %s83, 0
      %s86 = sadd.s32 %s85, 1
      %s87 = scalar_select %p84, %s85, %s86
      %p90 = pneg %p84
      %p91 = scmp.eq.s32.totalorder %s9, 1
      %p92 = por %p90, %p91
      %p93 = scmp.ne.s32.totalorder %s85, %s88
      %p94 = scmp.eq.s32.totalorder %s9, 0
      %p95 = por %p93, %p94
      %p96 = scmp.ne.s32.totalorder %s85, %s88
      %p97 = scmp.eq.s32.totalorder %s14, 1
      %p98 = por %p96, %p97
      %p99 = scmp.ne.s32.totalorder %s88, %s89
      %p100 = scmp.eq.s32.totalorder %s14, 0
      %p101 = por %p99, %p100
      %p102 = scmp.ne.s32.totalorder %s88, %s89
      %p103 = scmp.eq.s32.totalorder %s15, 1
      %p104 = por %p102, %p103
      %p106 = scmp.ne.s32.totalorder %s89, %s105
      %p107 = scmp.eq.s32.totalorder %s15, 0
      %p108 = por %p106, %p107
      %s109 = ssub.s32 %s16, %s28
      %s110 = ssub.s32 %s17, %s24
      %s111 = sor.u32 %s109, %s110
      %p112 = scmp.eq.s32.totalorder %s111, 0
      %s114 = sadd.s32 %s113, 1
      %s115 = scalar_select %p112, %s113, %s114
      %p118 = pneg %p112
      %p119 = scmp.eq.s32.totalorder %s9, 1
      %p120 = por %p118, %p119
      %p121 = scmp.ne.s32.totalorder %s113, %s116
      %p122 = scmp.eq.s32.totalorder %s9, 0
      %p123 = por %p121, %p122
      %p124 = scmp.ne.s32.totalorder %s113, %s116
      %p125 = scmp.eq.s32.totalorder %s14, 1
      %p126 = por %p124, %p125
      %p127 = scmp.ne.s32.totalorder %s116, %s117
      %p128 = scmp.eq.s32.totalorder %s14, 0
      %p129 = por %p127, %p128
      %p130 = scmp.ne.s32.totalorder %s116, %s117
      %p131 = scmp.eq.s32.totalorder %s15, 1
      %p132 = por %p130, %p131
      %p134 = scmp.ne.s32.totalorder %s117, %s133
      %p135 = scmp.eq.s32.totalorder %s15, 0
      %p136 = por %p134, %p135
      %p137 = scmp.le.s32.totalorder 1, %s9
      %p138 = scmp.lt.s32.totalorder %s9, 3
      %p139 = pnand %p137, %p138
      %p140 = pneg %p139
      // Predicated region
      $region9: #{tpu_custom_call.1} parent=5 // pred_check
        _
      $region10: #{tpu_custom_call.1} parent=5 // pred_check_branch
        %142 = sbr.rel (%p139) target = $region12
      $region11: #{tpu_custom_call.1} parent=5 // pred_region
        %s143 = ssub.s32 %s9, 1
      $region12: #{tpu_custom_call.1} parent=5 // pred_fallthru
        _
      %p144 = scmp.lt.s32.totalorder %s9, 2
      // Predicated region
      $region13: #{tpu_custom_call.1} parent=5 // pred_check
        %p145 = pneg %p144
      $region14: #{tpu_custom_call.1} parent=5 // pred_check_branch
        %147 = sbr.rel (%p145) target = $region16
      $region15: #{tpu_custom_call.1} parent=5 // pred_region
        // Predicated region
        $region17: #{tpu_custom_call.1} parent=15 // pred_check
          %p148 = pneg %p43
        $region18: #{tpu_custom_call.1} parent=15 // pred_check_branch
          %150 = sbr.rel (%p148) target = $region20
        $region19: #{tpu_custom_call.1} parent=15 // pred_region
          %s151 = sand.u32 %s33, 1
          %s152 = sand.u32 %s33, 1
          %s153 = smul.addr %s152, 16
          %s154 = scalar_lea.vmem [#allocation2], %s153
          %s155 = smul.u32 2, %s16
          %s156 = smul.addr %s155, 2
          %s157 = sadd.s32 %s17, %s156
          %s158 = smul.addr %s157, 8
          %s159 = scalar_lea.vmem %s0, %s158
          // Predicated region
          $region21: #{tpu_custom_call.1} parent=19 // pred_check
            _
          $region22: #{tpu_custom_call.1} parent=19 // pred_check_branch
            %161 = sbr.rel (0) target = $region24
          $region23: #{tpu_custom_call.1} parent=19 // pred_region
            // Predicated region
            $region25: #{tpu_custom_call.1} parent=23 // pred_check
              _
            $region26: #{tpu_custom_call.1} parent=23 // pred_check_branch
              %163 = sbr.rel (0) target = $region28
            $region27: #{tpu_custom_call.1} parent=23 // pred_region
              // Predicated region
              $region40: #{tpu_custom_call.1} parent=27 // pred_check
                _
              $region41: #{tpu_custom_call.1} parent=27 // pred_check_branch
                %181 = sbr.rel (0) target = $region43
              $region42: #{tpu_custom_call.1} parent=27 // pred_region
                loop: start=0, step=1, limit=1
                $region44: #{tpu_custom_call.1} parent=42 // loop_pre_header
                  _
                $region45: #{tpu_custom_call.1} parent=42 // loop_header
                  %s183 = sphi 0, %s187
                  %p184 = scmp.ge.s32.totalorder %s183, 1
                  %s188 = sphi %s159, %s159
                  %s189 = sphi %s154, %s154
                $region46: #{tpu_custom_call.1} parent=42 // loop_header_branch
                  %186 = sbr.rel (%p184) target = $region50
                $region47: #{tpu_custom_call.1} parent=42 // loop_body
                  %v190 = vld [vmem:[%s188] sm:$0xff]
                  %191 = vst [vmem:[%s189] sm:$0xff] %v190
                  %v192 = vld [vmem:[%s188 + $0x10] sm:$0xff]
                  %193 = vst [vmem:[%s189 + $0x8] sm:$0xff] %v192
                $region48: #{tpu_custom_call.1} parent=42 // loop_footer
                  %s187 = sadd.s32 1, %s183
                $region49: #{tpu_custom_call.1} parent=42 // loop_footer_branch
                  %182 = sbr.rel target = $region45
                $region50: #{tpu_custom_call.1} parent=42 // loop_exit
                  _
              $region43: #{tpu_custom_call.1} parent=27 // pred_fallthru
                _
              // Predicated region
              $region51: #{tpu_custom_call.1} parent=27 // pred_check
                _
              $region52: #{tpu_custom_call.1} parent=27 // pred_check_branch
                %195 = sbr.rel target = $region54
              $region53: #{tpu_custom_call.1} parent=27 // pred_region
                _
              $region54: #{tpu_custom_call.1} parent=27 // pred_fallthru
                _
            $region28: #{tpu_custom_call.1} parent=23 // pred_fallthru
              _
            // Predicated region
            $region29: #{tpu_custom_call.1} parent=23 // pred_check
              _
            $region30: #{tpu_custom_call.1} parent=23 // pred_check_branch
              %165 = sbr.rel target = $region32
            $region31: #{tpu_custom_call.1} parent=23 // pred_region
              %s167 = ssub.s32 256, 1
              loop: start=0, step=1, limit=1
              $region33: #{tpu_custom_call.1} parent=31 // loop_pre_header
                _
              $region34: #{tpu_custom_call.1} parent=31 // loop_header
                %s169 = sphi 0, %s173
                %p170 = scmp.ge.s32.totalorder %s169, 1
                %s174 = sphi %s159, %s159
                %s175 = sphi %s154, %s154
              $region35: #{tpu_custom_call.1} parent=31 // loop_header_branch
                %172 = sbr.rel (%p170) target = $region39
              $region36: #{tpu_custom_call.1} parent=31 // loop_body
                %v176 = vld [vmem:[%s174] sm:%s167]
                %177 = vst [vmem:[%s175] sm:%s167] %v176
                %v178 = vld [vmem:[%s174 + $0x10] sm:%s167]
                %179 = vst [vmem:[%s175 + $0x8] sm:%s167] %v178
              $region37: #{tpu_custom_call.1} parent=31 // loop_footer
                %s173 = sadd.s32 1, %s169
              $region38: #{tpu_custom_call.1} parent=31 // loop_footer_branch
                %168 = sbr.rel target = $region34
              $region39: #{tpu_custom_call.1} parent=31 // loop_exit
                _
            $region32: #{tpu_custom_call.1} parent=23 // pred_fallthru
              _
          $region24: #{tpu_custom_call.1} parent=19 // pred_fallthru
            _
          %196 = vnop
        $region20: #{tpu_custom_call.1} parent=15 // pred_fallthru
          _
        // Predicated region
        $region55: #{tpu_custom_call.1} parent=15 // pred_check
          %p197 = pneg %p69
        $region56: #{tpu_custom_call.1} parent=15 // pred_check_branch
          %199 = sbr.rel (%p197) target = $region58
        $region57: #{tpu_custom_call.1} parent=15 // pred_region
          %s200 = smul.u32 8, %s17
          %p201 = scmp.lt.s32.totalorder %s200, 15
          %s202 = scalar_select %p201, %s200, 15
          %s203 = smul.addr %s202, 2
          %s204 = smul.addr %s203, 8
          %s205 = scalar_lea.vmem %s1, %s204
          %s206 = smul.u32 8, %s17
        $region58: #{tpu_custom_call.1} parent=15 // pred_fallthru
          _
        // Predicated region
        $region59: #{tpu_custom_call.1} parent=15 // pred_check
          %p207 = pneg %p95
        $region60: #{tpu_custom_call.1} parent=15 // pred_check_branch
          %209 = sbr.rel (%p207) target = $region62
        $region61: #{tpu_custom_call.1} parent=15 // pred_region
          %p210 = scmp.lt.s32.totalorder %s17, 1
          %s211 = scalar_select %p210, %s17, 1
          %s212 = smul.addr %s211, 8
          %s213 = scalar_lea.vmem %s2, %s212
        $region62: #{tpu_custom_call.1} parent=15 // pred_fallthru
          _
      $region16: #{tpu_custom_call.1} parent=5 // pred_fallthru
        _
      %p214 = scmp.le.s32.totalorder 1, %s9
      %p215 = scmp.lt.s32.totalorder %s9, 3
      %p216 = pnand %p214, %p215
      %p217 = pneg %p216
      // Predicated region
      $region63: #{tpu_custom_call.1} parent=5 // pred_check
        _
      $region64: #{tpu_custom_call.1} parent=5 // pred_check_branch
        %219 = sbr.rel (%p216) target = $region66
      $region65: #{tpu_custom_call.1} parent=5 // pred_region
        %s220 = ssub.s32 %s9, 1
        %s221 = sand.u32 %s36, 1
        %s222 = sand.u32 %s36, 1
        %s223 = smul.addr %s222, 16
        %s224 = scalar_lea.vmem [#allocation2], %s223
        // Predicated region
        $region67: #{tpu_custom_call.1} parent=65 // pred_check
          %p225 = pneg %p49
        $region68: #{tpu_custom_call.1} parent=65 // pred_check_branch
          %227 = sbr.rel (%p225) target = $region70
        $region69: #{tpu_custom_call.1} parent=65 // pred_region
          _
        $region70: #{tpu_custom_call.1} parent=65 // pred_fallthru
          _
        %s228 = sand.u32 %s36, 1
        %s229 = sand.u32 %s36, 1
        %s230 = smul.addr %s229, 16
        %s231 = scalar_lea.vmem [#allocation2], %s230
        %p232 = pneg %p49
        %p233 = pneg %p46
        %s234 = smul.u32 8, %s19
        %p235 = scmp.lt.s32.totalorder %s234, 15
        %s236 = scalar_select %p235, %s234, 15
        %s237 = smul.addr %s236, 2
        %s238 = smul.addr %s237, 8
        %s239 = scalar_lea.vmem %s1, %s238
        %p240 = pneg %p75
        %p241 = pneg %p72
        %p242 = scmp.lt.s32.totalorder %s19, 1
        %s243 = scalar_select %p242, %s19, 1
        %s244 = smul.addr %s243, 8
        %s245 = scalar_lea.vmem %s2, %s244
        %p246 = pneg %p101
        %p247 = pneg %p98
        %p248 = pneg %p129
        %p249 = pneg %p126
        %s250 = sand.u32 %s116, 1
        %s251 = sand.u32 %s116, 1
        %s252 = smul.addr %s251, 16
        %s253 = scalar_lea.vmem [#allocation3], %s252
        %s254 = smul.u32 2, %s18
        %s255 = smul.u32 8, %s19
        %p256 = scmp.lt.s32.totalorder %s255, 15
        %s257 = scalar_select %p256, %s255, 15
        %s258 = smul.addr %s257, 2
        %s259 = smul.addr %s258, 8
        %s260 = scalar_lea.vmem %s1, %s259
        %s261 = smul.u32 8, %s19
        %p262 = scmp.lt.s32.totalorder %s19, 1
        %s263 = scalar_select %p262, %s19, 1
        %s264 = smul.addr %s263, 8
        %s265 = scalar_lea.vmem %s2, %s264
        %s266 = smul.u32 2, %s18
        %v267 = vld [vmem:[%s224] sm:$0xff]
        %v268 = vld [vmem:[%s224 + $0x8] sm:$0xff]
        %v269 = vld [vmem:[%s260] sm:$0xff]
        %v270 = vld [vmem:[%s260 + $0x8] sm:$0xff]
        %v271 = vld [vmem:[%s260 + $0x10] sm:$0xff]
        %v272 = vld [vmem:[%s260 + $0x18] sm:$0xff]
        %v273 = vld [vmem:[%s260 + $0x20] sm:$0xff]
        %v274 = vld [vmem:[%s260 + $0x28] sm:$0xff]
        %v275 = vld [vmem:[%s260 + $0x30] sm:$0xff]
        %v276 = vld [vmem:[%s260 + $0x38] sm:$0xff]
        %v277 = vld [vmem:[%s260 + $0x40] sm:$0xff]
        %v278 = vld [vmem:[%s260 + $0x48] sm:$0xff]
        %v279 = vld [vmem:[%s260 + $0x50] sm:$0xff]
        %v280 = vld [vmem:[%s260 + $0x58] sm:$0xff]
        %v281 = vld [vmem:[%s260 + $0x60] sm:$0xff]
        %v282 = vld [vmem:[%s260 + $0x68] sm:$0xff]
        %v283 = vld [vmem:[%s260 + $0x70] sm:$0xff]
        %v284 = vld [vmem:[%s260 + $0x78] sm:$0xff]
        %285 = vxpose.xlu0.b32.start [1/16] %v267, 128
        %286 = vxpose.xlu0.b32.cont [2/16] 0.0, 128
        %287 = vxpose.xlu0.b32.cont [3/16] 0.0, 128
        %288 = vxpose.xlu0.b32.cont [4/16] 0.0, 128
        %289 = vxpose.xlu0.b32.cont [5/16] 0.0, 128
        %290 = vxpose.xlu0.b32.cont [6/16] 0.0, 128
        %291 = vxpose.xlu0.b32.cont [7/16] 0.0, 128
        %292 = vxpose.xlu0.b32.cont [8/16] 0.0, 128
        %293 = vxpose.xlu0.b32.cont [9/16] 0.0, 128
        %294 = vxpose.xlu0.b32.cont [10/16] 0.0, 128
        %295 = vxpose.xlu0.b32.cont [11/16] 0.0, 128
        %296 = vxpose.xlu0.b32.cont [12/16] 0.0, 128
        %297 = vxpose.xlu0.b32.cont [13/16] 0.0, 128
        %298 = vxpose.xlu0.b32.cont [14/16] 0.0, 128
        %299 = vxpose.xlu0.b32.cont [15/16] 0.0, 128
        %300 = vxpose.xlu0.b32.end [16/16] 0.0, 128
        %v301 = vpop.trf.xlu0
        %v302 = vpop.trf.xlu0
        %v303 = vpop.trf.xlu0
        %v304 = vpop.trf.xlu0
        %v305 = vpop.trf.xlu0
        %v306 = vpop.trf.xlu0
        %v307 = vpop.trf.xlu0
        %v308 = vpop.trf.xlu0
        %v309 = vpop.trf.xlu0
        %v310 = vpop.trf.xlu0
        %v311 = vpop.trf.xlu0
        %v312 = vpop.trf.xlu0
        %v313 = vpop.trf.xlu0
        %v314 = vpop.trf.xlu0
        %v315 = vpop.trf.xlu0
        %v316 = vpop.trf.xlu0
        %317 = vxpose.xlu0.b32.start [1/16] %v268, 128
        %318 = vxpose.xlu0.b32.cont [2/16] 0.0, 128
        %319 = vxpose.xlu0.b32.cont [3/16] 0.0, 128
        %320 = vxpose.xlu0.b32.cont [4/16] 0.0, 128
        %321 = vxpose.xlu0.b32.cont [5/16] 0.0, 128
        %322 = vxpose.xlu0.b32.cont [6/16] 0.0, 128
        %323 = vxpose.xlu0.b32.cont [7/16] 0.0, 128
        %324 = vxpose.xlu0.b32.cont [8/16] 0.0, 128
        %325 = vxpose.xlu0.b32.cont [9/16] 0.0, 128
        %326 = vxpose.xlu0.b32.cont [10/16] 0.0, 128
        %327 = vxpose.xlu0.b32.cont [11/16] 0.0, 128
        %328 = vxpose.xlu0.b32.cont [12/16] 0.0, 128
        %329 = vxpose.xlu0.b32.cont [13/16] 0.0, 128
        %330 = vxpose.xlu0.b32.cont [14/16] 0.0, 128
        %331 = vxpose.xlu0.b32.cont [15/16] 0.0, 128
        %332 = vxpose.xlu0.b32.end [16/16] 0.0, 128
        %v333 = vpop.trf.xlu0
        %v334 = vpop.trf.xlu0
        %v335 = vpop.trf.xlu0
        %v336 = vpop.trf.xlu0
        %v337 = vpop.trf.xlu0
        %v338 = vpop.trf.xlu0
        %v339 = vpop.trf.xlu0
        %v340 = vpop.trf.xlu0
        %v341 = vpop.trf.xlu0
        %v342 = vpop.trf.xlu0
        %v343 = vpop.trf.xlu0
        %v344 = vpop.trf.xlu0
        %v345 = vpop.trf.xlu0
        %v346 = vpop.trf.xlu0
        %v347 = vpop.trf.xlu0
        %v348 = vpop.trf.xlu0
        %v349 = vrot.slane %v301, 4
        %vm350 = vcmask 1047556
        %v351 = vsel %vm350, 0.0, %v349
        %v353 = vunpack.c.l.s4 1983009808
        %v354 = vunpack.c.0.s8 %v353
        %v355 = vperm.slane %v301, %v354
        %v357 = vunpack.c.l.s4 1983009808
        %v358 = vunpack.c.0.s8 %v357
        %v359 = vperm.slane %v351, %v358
        %v360 = vrot.slane %v333, 4
        %v361 = vsel %vm350, 0.0, %v360
        %v363 = vunpack.c.l.s4 1983009808
        %v364 = vunpack.c.0.s8 %v363
        %v365 = vperm.slane %v333, %v364
        %v367 = vunpack.c.l.s4 1983009808
        %v368 = vunpack.c.0.s8 %v367
        %v369 = vperm.slane %v361, %v368
        %v370 = vrot.slane %v365, 4
        %v371 = vsel %vm350, %v370, %v355
        %v372 = vrot.slane %v355, 4
        %v373 = vsel %vm350, %v365, %v372
        %v375 = vunpack.c.l.s4 1934713408
        %v376 = vunpack.c.0.s8 %v375
        %v377 = vperm.slane %v371, %v376
        %v379 = vunpack.c.l.s4 1934713408
        %v380 = vunpack.c.0.s8 %v379
        %v381 = vperm.slane %v373, %v380
        %v382 = vrot.slane %v369, 4
        %v383 = vsel %vm350, %v382, %v359
        %v384 = vrot.slane %v359, 4
        %v385 = vsel %vm350, %v369, %v384
        %v387 = vunpack.c.l.s4 1934713408
        %v388 = vunpack.c.0.s8 %v387
        %v389 = vperm.slane %v383, %v388
        %v391 = vunpack.c.l.s4 1934713408
        %v392 = vunpack.c.0.s8 %v391
        %v393 = vperm.slane %v385, %v392
        %v394 = vrot.slane %v377, 4
        %v395 = vsel %vm350, 0.0, %v394
        %v396 = vrot.slane %v381, 4
        %v397 = vsel %vm350, 0.0, %v396
        %v398 = vrot.slane %v389, 4
        %v399 = vsel %vm350, 0.0, %v398
        %v400 = vrot.slane %v393, 4
        %v401 = vsel %vm350, 0.0, %v400
        %v402 = vrot.slane %v302, 4
        %v403 = vsel %vm350, 0.0, %v402
        %v405 = vunpack.c.l.s4 1983009808
        %v406 = vunpack.c.0.s8 %v405
        %v407 = vperm.slane %v302, %v406
        %v409 = vunpack.c.l.s4 1983009808
        %v410 = vunpack.c.0.s8 %v409
        %v411 = vperm.slane %v403, %v410
        %v412 = vrot.slane %v334, 4
        %v413 = vsel %vm350, 0.0, %v412
        %v415 = vunpack.c.l.s4 1983009808
        %v416 = vunpack.c.0.s8 %v415
        %v417 = vperm.slane %v334, %v416
        %v419 = vunpack.c.l.s4 1983009808
        %v420 = vunpack.c.0.s8 %v419
        %v421 = vperm.slane %v413, %v420
        %v422 = vrot.slane %v417, 4
        %v423 = vsel %vm350, %v422, %v407
        %v424 = vrot.slane %v407, 4
        %v425 = vsel %vm350, %v417, %v424
        %v427 = vunpack.c.l.s4 1934713408
        %v428 = vunpack.c.0.s8 %v427
        %v429 = vperm.slane %v423, %v428
        %v431 = vunpack.c.l.s4 1934713408
        %v432 = vunpack.c.0.s8 %v431
        %v433 = vperm.slane %v425, %v432
        %v434 = vrot.slane %v421, 4
        %v435 = vsel %vm350, %v434, %v411
        %v436 = vrot.slane %v411, 4
        %v437 = vsel %vm350, %v421, %v436
        %v439 = vunpack.c.l.s4 1934713408
        %v440 = vunpack.c.0.s8 %v439
        %v441 = vperm.slane %v435, %v440
        %v443 = vunpack.c.l.s4 1934713408
        %v444 = vunpack.c.0.s8 %v443
        %v445 = vperm.slane %v437, %v444
        %v446 = vrot.slane %v429, 4
        %v447 = vsel %vm350, 0.0, %v446
        %v448 = vrot.slane %v433, 4
        %v449 = vsel %vm350, 0.0, %v448
        %v450 = vrot.slane %v441, 4
        %v451 = vsel %vm350, 0.0, %v450
        %v452 = vrot.slane %v445, 4
        %v453 = vsel %vm350, 0.0, %v452
        %454 = vxpose.xlu0.b32.start [1/16] %v377, 128
        %455 = vxpose.xlu0.b32.cont [2/16] 0.0, 128
        %456 = vxpose.xlu0.b32.cont [3/16] 0.0, 128
        %457 = vxpose.xlu0.b32.cont [4/16] 0.0, 128
        %458 = vxpose.xlu0.b32.cont [5/16] 0.0, 128
        %459 = vxpose.xlu0.b32.cont [6/16] 0.0, 128
        %460 = vxpose.xlu0.b32.cont [7/16] 0.0, 128
        %461 = vxpose.xlu0.b32.cont [8/16] 0.0, 128
        %462 = vxpose.xlu0.b32.cont [9/16] 0.0, 128
        %463 = vxpose.xlu0.b32.cont [10/16] 0.0, 128
        %464 = vxpose.xlu0.b32.cont [11/16] 0.0, 128
        %465 = vxpose.xlu0.b32.cont [12/16] 0.0, 128
        %466 = vxpose.xlu0.b32.cont [13/16] 0.0, 128
        %467 = vxpose.xlu0.b32.cont [14/16] 0.0, 128
        %468 = vxpose.xlu0.b32.cont [15/16] 0.0, 128
        %469 = vxpose.xlu0.b32.end [16/16] 0.0, 128
        %v470 = vpop.trf.xlu0
        %v471 = vpop.trf.xlu0
        %v472 = vpop.trf.xlu0
        %v473 = vpop.trf.xlu0
        %v474 = vpop.trf.xlu0
        %v475 = vpop.trf.xlu0
        %v476 = vpop.trf.xlu0
        %v477 = vpop.trf.xlu0
        %v478 = vpop.trf.xlu0
        %v479 = vpop.trf.xlu0
        %v480 = vpop.trf.xlu0
        %v481 = vpop.trf.xlu0
        %v482 = vpop.trf.xlu0
        %v483 = vpop.trf.xlu0
        %v484 = vpop.trf.xlu0
        %v485 = vpop.trf.xlu0
        %486 = vxpose.xlu0.b32.start [1/16] %v395, 128
        %487 = vxpose.xlu0.b32.cont [2/16] 0.0, 128
        %488 = vxpose.xlu0.b32.cont [3/16] 0.0, 128
        %489 = vxpose.xlu0.b32.cont [4/16] 0.0, 128
        %490 = vxpose.xlu0.b32.cont [5/16] 0.0, 128
        %491 = vxpose.xlu0.b32.cont [6/16] 0.0, 128
        %492 = vxpose.xlu0.b32.cont [7/16] 0.0, 128
        %493 = vxpose.xlu0.b32.cont [8/16] 0.0, 128
        %494 = vxpose.xlu0.b32.cont [9/16] 0.0, 128
        %495 = vxpose.xlu0.b32.cont [10/16] 0.0, 128
        %496 = vxpose.xlu0.b32.cont [11/16] 0.0, 128
        %497 = vxpose.xlu0.b32.cont [12/16] 0.0, 128
        %498 = vxpose.xlu0.b32.cont [13/16] 0.0, 128
        %499 = vxpose.xlu0.b32.cont [14/16] 0.0, 128
        %500 = vxpose.xlu0.b32.cont [15/16] 0.0, 128
        %501 = vxpose.xlu0.b32.end [16/16] 0.0, 128
        %v502 = vpop.trf.xlu0
        %v503 = vpop.trf.xlu0
        %v504 = vpop.trf.xlu0
        %v505 = vpop.trf.xlu0
        %v506 = vpop.trf.xlu0
        %v507 = vpop.trf.xlu0
        %v508 = vpop.trf.xlu0
        %v509 = vpop.trf.xlu0
        %v510 = vpop.trf.xlu0
        %v511 = vpop.trf.xlu0
        %v512 = vpop.trf.xlu0
        %v513 = vpop.trf.xlu0
        %v514 = vpop.trf.xlu0
        %v515 = vpop.trf.xlu0
        %v516 = vpop.trf.xlu0
        %v517 = vpop.trf.xlu0
        %518 = vxpose.xlu0.b32.start [1/16] %v381, 128
        %519 = vxpose.xlu0.b32.cont [2/16] 0.0, 128
        %520 = vxpose.xlu0.b32.cont [3/16] 0.0, 128
        %521 = vxpose.xlu0.b32.cont [4/16] 0.0, 128
        %522 = vxpose.xlu0.b32.cont [5/16] 0.0, 128
        %523 = vxpose.xlu0.b32.cont [6/16] 0.0, 128
        %524 = vxpose.xlu0.b32.cont [7/16] 0.0, 128
        %525 = vxpose.xlu0.b32.cont [8/16] 0.0, 128
        %526 = vxpose.xlu0.b32.cont [9/16] 0.0, 128
        %527 = vxpose.xlu0.b32.cont [10/16] 0.0, 128
        %528 = vxpose.xlu0.b32.cont [11/16] 0.0, 128
        %529 = vxpose.xlu0.b32.cont [12/16] 0.0, 128
        %530 = vxpose.xlu0.b32.cont [13/16] 0.0, 128
        %531 = vxpose.xlu0.b32.cont [14/16] 0.0, 128
        %532 = vxpose.xlu0.b32.cont [15/16] 0.0, 128
        %533 = vxpose.xlu0.b32.end [16/16] 0.0, 128
        %v534 = vpop.trf.xlu0
        %v535 = vpop.trf.xlu0
        %v536 = vpop.trf.xlu0
        %v537 = vpop.trf.xlu0
        %v538 = vpop.trf.xlu0
        %v539 = vpop.trf.xlu0
        %v540 = vpop.trf.xlu0
        %v541 = vpop.trf.xlu0
        %v542 = vpop.trf.xlu0
        %v543 = vpop.trf.xlu0
        %v544 = vpop.trf.xlu0
        %v545 = vpop.trf.xlu0
        %v546 = vpop.trf.xlu0
        %v547 = vpop.trf.xlu0
        %v548 = vpop.trf.xlu0
        %v549 = vpop.trf.xlu0
        %550 = vxpose.xlu0.b32.start [1/16] %v397, 128
        %551 = vxpose.xlu0.b32.cont [2/16] 0.0, 128
        %552 = vxpose.xlu0.b32.cont [3/16] 0.0, 128
        %553 = vxpose.xlu0.b32.cont [4/16] 0.0, 128
        %554 = vxpose.xlu0.b32.cont [5/16] 0.0, 128
        %555 = vxpose.xlu0.b32.cont [6/16] 0.0, 128
        %556 = vxpose.xlu0.b32.cont [7/16] 0.0, 128
        %557 = vxpose.xlu0.b32.cont [8/16] 0.0, 128
        %558 = vxpose.xlu0.b32.cont [9/16] 0.0, 128
        %559 = vxpose.xlu0.b32.cont [10/16] 0.0, 128
        %560 = vxpose.xlu0.b32.cont [11/16] 0.0, 128
        %561 = vxpose.xlu0.b32.cont [12/16] 0.0, 128
        %562 = vxpose.xlu0.b32.cont [13/16] 0.0, 128
        %563 = vxpose.xlu0.b32.cont [14/16] 0.0, 128
        %564 = vxpose.xlu0.b32.cont [15/16] 0.0, 128
        %565 = vxpose.xlu0.b32.end [16/16] 0.0, 128
        %v566 = vpop.trf.xlu0
        %v567 = vpop.trf.xlu0
        %v568 = vpop.trf.xlu0
        %v569 = vpop.trf.xlu0
        %v570 = vpop.trf.xlu0
        %v571 = vpop.trf.xlu0
        %v572 = vpop.trf.xlu0
        %v573 = vpop.trf.xlu0
        %v574 = vpop.trf.xlu0
        %v575 = vpop.trf.xlu0
        %v576 = vpop.trf.xlu0
        %v577 = vpop.trf.xlu0
        %v578 = vpop.trf.xlu0
        %v579 = vpop.trf.xlu0
        %v580 = vpop.trf.xlu0
        %v581 = vpop.trf.xlu0
        %582 = vxpose.xlu0.b32.start [1/16] %v389, 128
        %583 = vxpose.xlu0.b32.cont [2/16] 0.0, 128
        %584 = vxpose.xlu0.b32.cont [3/16] 0.0, 128
        %585 = vxpose.xlu0.b32.cont [4/16] 0.0, 128
        %586 = vxpose.xlu0.b32.cont [5/16] 0.0, 128
        %587 = vxpose.xlu0.b32.cont [6/16] 0.0, 128
        %588 = vxpose.xlu0.b32.cont [7/16] 0.0, 128
        %589 = vxpose.xlu0.b32.cont [8/16] 0.0, 128
        %590 = vxpose.xlu0.b32.cont [9/16] 0.0, 128
        %591 = vxpose.xlu0.b32.cont [10/16] 0.0, 128
        %592 = vxpose.xlu0.b32.cont [11/16] 0.0, 128
        %593 = vxpose.xlu0.b32.cont [12/16] 0.0, 128
        %594 = vxpose.xlu0.b32.cont [13/16] 0.0, 128
        %595 = vxpose.xlu0.b32.cont [14/16] 0.0, 128
        %596 = vxpose.xlu0.b32.cont [15/16] 0.0, 128
        %597 = vxpose.xlu0.b32.end [16/16] 0.0, 128
        %v598 = vpop.trf.xlu0
        %v599 = vpop.trf.xlu0
        %v600 = vpop.trf.xlu0
        %v601 = vpop.trf.xlu0
        %v602 = vpop.trf.xlu0
        %v603 = vpop.trf.xlu0
        %v604 = vpop.trf.xlu0
        %v605 = vpop.trf.xlu0
        %v606 = vpop.trf.xlu0
        %v607 = vpop.trf.xlu0
        %v608 = vpop.trf.xlu0
        %v609 = vpop.trf.xlu0
        %v610 = vpop.trf.xlu0
        %v611 = vpop.trf.xlu0
        %v612 = vpop.trf.xlu0
        %v613 = vpop.trf.xlu0
        %614 = vxpose.xlu0.b32.start [1/16] %v399, 128
        %615 = vxpose.xlu0.b32.cont [2/16] 0.0, 128
        %616 = vxpose.xlu0.b32.cont [3/16] 0.0, 128
        %617 = vxpose.xlu0.b32.cont [4/16] 0.0, 128
        %618 = vxpose.xlu0.b32.cont [5/16] 0.0, 128
        %619 = vxpose.xlu0.b32.cont [6/16] 0.0, 128
        %620 = vxpose.xlu0.b32.cont [7/16] 0.0, 128
        %621 = vxpose.xlu0.b32.cont [8/16] 0.0, 128
        %622 = vxpose.xlu0.b32.cont [9/16] 0.0, 128
        %623 = vxpose.xlu0.b32.cont [10/16] 0.0, 128
        %624 = vxpose.xlu0.b32.cont [11/16] 0.0, 128
        %625 = vxpose.xlu0.b32.cont [12/16] 0.0, 128
        %626 = vxpose.xlu0.b32.cont [13/16] 0.0, 128
        %627 = vxpose.xlu0.b32.cont [14/16] 0.0, 128
        %628 = vxpose.xlu0.b32.cont [15/16] 0.0, 128
        %629 = vxpose.xlu0.b32.end [16/16] 0.0, 128
        %v630 = vpop.trf.xlu0
        %v631 = vpop.trf.xlu0
        %v632 = vpop.trf.xlu0
        %v633 = vpop.trf.xlu0
        %v634 = vpop.trf.xlu0
        %v635 = vpop.trf.xlu0
        %v636 = vpop.trf.xlu0
        %v637 = vpop.trf.xlu0
        %v638 = vpop.trf.xlu0
        %v639 = vpop.trf.xlu0
        %v640 = vpop.trf.xlu0
        %v641 = vpop.trf.xlu0
        %v642 = vpop.trf.xlu0
        %v643 = vpop.trf.xlu0
        %v644 = vpop.trf.xlu0
        %v645 = vpop.trf.xlu0
        %646 = vxpose.xlu0.b32.start [1/16] %v393, 128
        %647 = vxpose.xlu0.b32.cont [2/16] 0.0, 128
        %648 = vxpose.xlu0.b32.cont [3/16] 0.0, 128
        %649 = vxpose.xlu0.b32.cont [4/16] 0.0, 128
        %650 = vxpose.xlu0.b32.cont [5/16] 0.0, 128
        %651 = vxpose.xlu0.b32.cont [6/16] 0.0, 128
        %652 = vxpose.xlu0.b32.cont [7/16] 0.0, 128
        %653 = vxpose.xlu0.b32.cont [8/16] 0.0, 128
        %654 = vxpose.xlu0.b32.cont [9/16] 0.0, 128
        %655 = vxpose.xlu0.b32.cont [10/16] 0.0, 128
        %656 = vxpose.xlu0.b32.cont [11/16] 0.0, 128
        %657 = vxpose.xlu0.b32.cont [12/16] 0.0, 128
        %658 = vxpose.xlu0.b32.cont [13/16] 0.0, 128
        %659 = vxpose.xlu0.b32.cont [14/16] 0.0, 128
        %660 = vxpose.xlu0.b32.cont [15/16] 0.0, 128
        %661 = vxpose.xlu0.b32.end [16/16] 0.0, 128
        %v662 = vpop.trf.xlu0
        %v663 = vpop.trf.xlu0
        %v664 = vpop.trf.xlu0
        %v665 = vpop.trf.xlu0
        %v666 = vpop.trf.xlu0
        %v667 = vpop.trf.xlu0
        %v668 = vpop.trf.xlu0
        %v669 = vpop.trf.xlu0
        %v670 = vpop.trf.xlu0
        %v671 = vpop.trf.xlu0
        %v672 = vpop.trf.xlu0
        %v673 = vpop.trf.xlu0
        %v674 = vpop.trf.xlu0
        %v675 = vpop.trf.xlu0
        %v676 = vpop.trf.xlu0
        %v677 = vpop.trf.xlu0
        %678 = vxpose.xlu0.b32.start [1/16] %v401, 128
        %679 = vxpose.xlu0.b32.cont [2/16] 0.0, 128
        %680 = vxpose.xlu0.b32.cont [3/16] 0.0, 128
        %681 = vxpose.xlu0.b32.cont [4/16] 0.0, 128
        %682 = vxpose.xlu0.b32.cont [5/16] 0.0, 128
        %683 = vxpose.xlu0.b32.cont [6/16] 0.0, 128
        %684 = vxpose.xlu0.b32.cont [7/16] 0.0, 128
        %685 = vxpose.xlu0.b32.cont [8/16] 0.0, 128
        %686 = vxpose.xlu0.b32.cont [9/16] 0.0, 128
        %687 = vxpose.xlu0.b32.cont [10/16] 0.0, 128
        %688 = vxpose.xlu0.b32.cont [11/16] 0.0, 128
        %689 = vxpose.xlu0.b32.cont [12/16] 0.0, 128
        %690 = vxpose.xlu0.b32.cont [13/16] 0.0, 128
        %691 = vxpose.xlu0.b32.cont [14/16] 0.0, 128
        %692 = vxpose.xlu0.b32.cont [15/16] 0.0, 128
        %693 = vxpose.xlu0.b32.end [16/16] 0.0, 128
        %v694 = vpop.trf.xlu0
        %v695 = vpop.trf.xlu0
        %v696 = vpop.trf.xlu0
        %v697 = vpop.trf.xlu0
        %v698 = vpop.trf.xlu0
        %v699 = vpop.trf.xlu0
        %v700 = vpop.trf.xlu0
        %v701 = vpop.trf.xlu0
        %v702 = vpop.trf.xlu0
        %v703 = vpop.trf.xlu0
        %v704 = vpop.trf.xlu0
        %v705 = vpop.trf.xlu0
        %v706 = vpop.trf.xlu0
        %v707 = vpop.trf.xlu0
        %v708 = vpop.trf.xlu0
        %v709 = vpop.trf.xlu0
        %710 = vxpose.xlu0.b32.start [1/16] %v429, 128
        %711 = vxpose.xlu0.b32.cont [2/16] 0.0, 128
        %712 = vxpose.xlu0.b32.cont [3/16] 0.0, 128
        %713 = vxpose.xlu0.b32.cont [4/16] 0.0, 128
        %714 = vxpose.xlu0.b32.cont [5/16] 0.0, 128
        %715 = vxpose.xlu0.b32.cont [6/16] 0.0, 128
        %716 = vxpose.xlu0.b32.cont [7/16] 0.0, 128
        %717 = vxpose.xlu0.b32.cont [8/16] 0.0, 128
        %718 = vxpose.xlu0.b32.cont [9/16] 0.0, 128
        %719 = vxpose.xlu0.b32.cont [10/16] 0.0, 128
        %720 = vxpose.xlu0.b32.cont [11/16] 0.0, 128
        %721 = vxpose.xlu0.b32.cont [12/16] 0.0, 128
        %722 = vxpose.xlu0.b32.cont [13/16] 0.0, 128
        %723 = vxpose.xlu0.b32.cont [14/16] 0.0, 128
        %724 = vxpose.xlu0.b32.cont [15/16] 0.0, 128
        %725 = vxpose.xlu0.b32.end [16/16] 0.0, 128
        %v726 = vpop.trf.xlu0
        %v727 = vpop.trf.xlu0
        %v728 = vpop.trf.xlu0
        %v729 = vpop.trf.xlu0
        %v730 = vpop.trf.xlu0
        %v731 = vpop.trf.xlu0
        %v732 = vpop.trf.xlu0
        %v733 = vpop.trf.xlu0
        %v734 = vpop.trf.xlu0
        %v735 = vpop.trf.xlu0
        %v736 = vpop.trf.xlu0
        %v737 = vpop.trf.xlu0
        %v738 = vpop.trf.xlu0
        %v739 = vpop.trf.xlu0
        %v740 = vpop.trf.xlu0
        %v741 = vpop.trf.xlu0
        %742 = vxpose.xlu0.b32.start [1/16] %v447, 128
        %743 = vxpose.xlu0.b32.cont [2/16] 0.0, 128
        %744 = vxpose.xlu0.b32.cont [3/16] 0.0, 128
        %745 = vxpose.xlu0.b32.cont [4/16] 0.0, 128
        %746 = vxpose.xlu0.b32.cont [5/16] 0.0, 128
        %747 = vxpose.xlu0.b32.cont [6/16] 0.0, 128
        %748 = vxpose.xlu0.b32.cont [7/16] 0.0, 128
        %749 = vxpose.xlu0.b32.cont [8/16] 0.0, 128
        %750 = vxpose.xlu0.b32.cont [9/16] 0.0, 128
        %751 = vxpose.xlu0.b32.cont [10/16] 0.0, 128
        %752 = vxpose.xlu0.b32.cont [11/16] 0.0, 128
        %753 = vxpose.xlu0.b32.cont [12/16] 0.0, 128
        %754 = vxpose.xlu0.b32.cont [13/16] 0.0, 128
        %755 = vxpose.xlu0.b32.cont [14/16] 0.0, 128
        %756 = vxpose.xlu0.b32.cont [15/16] 0.0, 128
        %757 = vxpose.xlu0.b32.end [16/16] 0.0, 128
        %v758 = vpop.trf.xlu0
        %v759 = vpop.trf.xlu0
        %v760 = vpop.trf.xlu0
        %v761 = vpop.trf.xlu0
        %v762 = vpop.trf.xlu0
        %v763 = vpop.trf.xlu0
        %v764 = vpop.trf.xlu0
        %v765 = vpop.trf.xlu0
        %v766 = vpop.trf.xlu0
        %v767 = vpop.trf.xlu0
        %v768 = vpop.trf.xlu0
        %v769 = vpop.trf.xlu0
        %v770 = vpop.trf.xlu0
        %v771 = vpop.trf.xlu0
        %v772 = vpop.trf.xlu0
        %v773 = vpop.trf.xlu0
        %774 = vxpose.xlu0.b32.start [1/16] %v433, 128
        %775 = vxpose.xlu0.b32.cont [2/16] 0.0, 128
        %776 = vxpose.xlu0.b32.cont [3/16] 0.0, 128
        %777 = vxpose.xlu0.b32.cont [4/16] 0.0, 128
        %778 = vxpose.xlu0.b32.cont [5/16] 0.0, 128
        %779 = vxpose.xlu0.b32.cont [6/16] 0.0, 128
        %780 = vxpose.xlu0.b32.cont [7/16] 0.0, 128
        %781 = vxpose.xlu0.b32.cont [8/16] 0.0, 128
        %782 = vxpose.xlu0.b32.cont [9/16] 0.0, 128
        %783 = vxpose.xlu0.b32.cont [10/16] 0.0, 128
        %784 = vxpose.xlu0.b32.cont [11/16] 0.0, 128
        %785 = vxpose.xlu0.b32.cont [12/16] 0.0, 128
        %786 = vxpose.xlu0.b32.cont [13/16] 0.0, 128
        %787 = vxpose.xlu0.b32.cont [14/16] 0.0, 128
        %788 = vxpose.xlu0.b32.cont [15/16] 0.0, 128
        %789 = vxpose.xlu0.b32.end [16/16] 0.0, 128
        %v790 = vpop.trf.xlu0
        %v791 = vpop.trf.xlu0
        %v792 = vpop.trf.xlu0
        %v793 = vpop.trf.xlu0
        %v794 = vpop.trf.xlu0
        %v795 = vpop.trf.xlu0
        %v796 = vpop.trf.xlu0
        %v797 = vpop.trf.xlu0
        %v798 = vpop.trf.xlu0
        %v799 = vpop.trf.xlu0
        %v800 = vpop.trf.xlu0
        %v801 = vpop.trf.xlu0
        %v802 = vpop.trf.xlu0
        %v803 = vpop.trf.xlu0
        %v804 = vpop.trf.xlu0
        %v805 = vpop.trf.xlu0
        %806 = vxpose.xlu0.b32.start [1/16] %v449, 128
        %807 = vxpose.xlu0.b32.cont [2/16] 0.0, 128
        %808 = vxpose.xlu0.b32.cont [3/16] 0.0, 128
        %809 = vxpose.xlu0.b32.cont [4/16] 0.0, 128
        %810 = vxpose.xlu0.b32.cont [5/16] 0.0, 128
        %811 = vxpose.xlu0.b32.cont [6/16] 0.0, 128
        %812 = vxpose.xlu0.b32.cont [7/16] 0.0, 128
        %813 = vxpose.xlu0.b32.cont [8/16] 0.0, 128
        %814 = vxpose.xlu0.b32.cont [9/16] 0.0, 128
        %815 = vxpose.xlu0.b32.cont [10/16] 0.0, 128
        %816 = vxpose.xlu0.b32.cont [11/16] 0.0, 128
        %817 = vxpose.xlu0.b32.cont [12/16] 0.0, 128
        %818 = vxpose.xlu0.b32.cont [13/16] 0.0, 128
        %819 = vxpose.xlu0.b32.cont [14/16] 0.0, 128
        %820 = vxpose.xlu0.b32.cont [15/16] 0.0, 128
        %821 = vxpose.xlu0.b32.end [16/16] 0.0, 128
        %v822 = vpop.trf.xlu0
        %v823 = vpop.trf.xlu0
        %v824 = vpop.trf.xlu0
        %v825 = vpop.trf.xlu0
        %v826 = vpop.trf.xlu0
        %v827 = vpop.trf.xlu0
        %v828 = vpop.trf.xlu0
        %v829 = vpop.trf.xlu0
        %v830 = vpop.trf.xlu0
        %v831 = vpop.trf.xlu0
        %v832 = vpop.trf.xlu0
        %v833 = vpop.trf.xlu0
        %v834 = vpop.trf.xlu0
        %v835 = vpop.trf.xlu0
        %v836 = vpop.trf.xlu0
        %v837 = vpop.trf.xlu0
        %838 = vxpose.xlu0.b32.start [1/16] %v441, 128
        %839 = vxpose.xlu0.b32.cont [2/16] 0.0, 128
        %840 = vxpose.xlu0.b32.cont [3/16] 0.0, 128
        %841 = vxpose.xlu0.b32.cont [4/16] 0.0, 128
        %842 = vxpose.xlu0.b32.cont [5/16] 0.0, 128
        %843 = vxpose.xlu0.b32.cont [6/16] 0.0, 128
        %844 = vxpose.xlu0.b32.cont [7/16] 0.0, 128
        %845 = vxpose.xlu0.b32.cont [8/16] 0.0, 128
        %846 = vxpose.xlu0.b32.cont [9/16] 0.0, 128
        %847 = vxpose.xlu0.b32.cont [10/16] 0.0, 128
        %848 = vxpose.xlu0.b32.cont [11/16] 0.0, 128
        %849 = vxpose.xlu0.b32.cont [12/16] 0.0, 128
        %850 = vxpose.xlu0.b32.cont [13/16] 0.0, 128
        %851 = vxpose.xlu0.b32.cont [14/16] 0.0, 128
        %852 = vxpose.xlu0.b32.cont [15/16] 0.0, 128
        %853 = vxpose.xlu0.b32.end [16/16] 0.0, 128
        %v854 = vpop.trf.xlu0
        %v855 = vpop.trf.xlu0
        %v856 = vpop.trf.xlu0
        %v857 = vpop.trf.xlu0
        %v858 = vpop.trf.xlu0
        %v859 = vpop.trf.xlu0
        %v860 = vpop.trf.xlu0
        %v861 = vpop.trf.xlu0
        %v862 = vpop.trf.xlu0
        %v863 = vpop.trf.xlu0
        %v864 = vpop.trf.xlu0
        %v865 = vpop.trf.xlu0
        %v866 = vpop.trf.xlu0
        %v867 = vpop.trf.xlu0
        %v868 = vpop.trf.xlu0
        %v869 = vpop.trf.xlu0
        %870 = vxpose.xlu0.b32.start [1/16] %v451, 128
        %871 = vxpose.xlu0.b32.cont [2/16] 0.0, 128
        %872 = vxpose.xlu0.b32.cont [3/16] 0.0, 128
        %873 = vxpose.xlu0.b32.cont [4/16] 0.0, 128
        %874 = vxpose.xlu0.b32.cont [5/16] 0.0, 128
        %875 = vxpose.xlu0.b32.cont [6/16] 0.0, 128
        %876 = vxpose.xlu0.b32.cont [7/16] 0.0, 128
        %877 = vxpose.xlu0.b32.cont [8/16] 0.0, 128
        %878 = vxpose.xlu0.b32.cont [9/16] 0.0, 128
        %879 = vxpose.xlu0.b32.cont [10/16] 0.0, 128
        %880 = vxpose.xlu0.b32.cont [11/16] 0.0, 128
        %881 = vxpose.xlu0.b32.cont [12/16] 0.0, 128
        %882 = vxpose.xlu0.b32.cont [13/16] 0.0, 128
        %883 = vxpose.xlu0.b32.cont [14/16] 0.0, 128
        %884 = vxpose.xlu0.b32.cont [15/16] 0.0, 128
        %885 = vxpose.xlu0.b32.end [16/16] 0.0, 128
        %v886 = vpop.trf.xlu0
        %v887 = vpop.trf.xlu0
        %v888 = vpop.trf.xlu0
        %v889 = vpop.trf.xlu0
        %v890 = vpop.trf.xlu0
        %v891 = vpop.trf.xlu0
        %v892 = vpop.trf.xlu0
        %v893 = vpop.trf.xlu0
        %v894 = vpop.trf.xlu0
        %v895 = vpop.trf.xlu0
        %v896 = vpop.trf.xlu0
        %v897 = vpop.trf.xlu0
        %v898 = vpop.trf.xlu0
        %v899 = vpop.trf.xlu0
        %v900 = vpop.trf.xlu0
        %v901 = vpop.trf.xlu0
        %902 = vxpose.xlu0.b32.start [1/16] %v445, 128
        %903 = vxpose.xlu0.b32.cont [2/16] 0.0, 128
        %904 = vxpose.xlu0.b32.cont [3/16] 0.0, 128
        %905 = vxpose.xlu0.b32.cont [4/16] 0.0, 128
        %906 = vxpose.xlu0.b32.cont [5/16] 0.0, 128
        %907 = vxpose.xlu0.b32.cont [6/16] 0.0, 128
        %908 = vxpose.xlu0.b32.cont [7/16] 0.0, 128
        %909 = vxpose.xlu0.b32.cont [8/16] 0.0, 128
        %910 = vxpose.xlu0.b32.cont [9/16] 0.0, 128
        %911 = vxpose.xlu0.b32.cont [10/16] 0.0, 128
        %912 = vxpose.xlu0.b32.cont [11/16] 0.0, 128
        %913 = vxpose.xlu0.b32.cont [12/16] 0.0, 128
        %914 = vxpose.xlu0.b32.cont [13/16] 0.0, 128
        %915 = vxpose.xlu0.b32.cont [14/16] 0.0, 128
        %916 = vxpose.xlu0.b32.cont [15/16] 0.0, 128
        %917 = vxpose.xlu0.b32.end [16/16] 0.0, 128
        %v918 = vpop.trf.xlu0
        %v919 = vpop.trf.xlu0
        %v920 = vpop.trf.xlu0
        %v921 = vpop.trf.xlu0
        %v922 = vpop.trf.xlu0
        %v923 = vpop.trf.xlu0
        %v924 = vpop.trf.xlu0
        %v925 = vpop.trf.xlu0
        %v926 = vpop.trf.xlu0
        %v927 = vpop.trf.xlu0
        %v928 = vpop.trf.xlu0
        %v929 = vpop.trf.xlu0
        %v930 = vpop.trf.xlu0
        %v931 = vpop.trf.xlu0
        %v932 = vpop.trf.xlu0
        %v933 = vpop.trf.xlu0
        %934 = vxpose.xlu0.b32.start [1/16] %v453, 128
        %935 = vxpose.xlu0.b32.cont [2/16] 0.0, 128
        %936 = vxpose.xlu0.b32.cont [3/16] 0.0, 128
        %937 = vxpose.xlu0.b32.cont [4/16] 0.0, 128
        %938 = vxpose.xlu0.b32.cont [5/16] 0.0, 128
        %939 = vxpose.xlu0.b32.cont [6/16] 0.0, 128
        %940 = vxpose.xlu0.b32.cont [7/16] 0.0, 128
        %941 = vxpose.xlu0.b32.cont [8/16] 0.0, 128
        %942 = vxpose.xlu0.b32.cont [9/16] 0.0, 128
        %943 = vxpose.xlu0.b32.cont [10/16] 0.0, 128
        %944 = vxpose.xlu0.b32.cont [11/16] 0.0, 128
        %945 = vxpose.xlu0.b32.cont [12/16] 0.0, 128
        %946 = vxpose.xlu0.b32.cont [13/16] 0.0, 128
        %947 = vxpose.xlu0.b32.cont [14/16] 0.0, 128
        %948 = vxpose.xlu0.b32.cont [15/16] 0.0, 128
        %949 = vxpose.xlu0.b32.end [16/16] 0.0, 128
        %v950 = vpop.trf.xlu0
        %v951 = vpop.trf.xlu0
        %v952 = vpop.trf.xlu0
        %v953 = vpop.trf.xlu0
        %v954 = vpop.trf.xlu0
        %v955 = vpop.trf.xlu0
        %v956 = vpop.trf.xlu0
        %v957 = vpop.trf.xlu0
        %v958 = vpop.trf.xlu0
        %v959 = vpop.trf.xlu0
        %v960 = vpop.trf.xlu0
        %v961 = vpop.trf.xlu0
        %v962 = vpop.trf.xlu0
        %v963 = vpop.trf.xlu0
        %v964 = vpop.trf.xlu0
        %v965 = vpop.trf.xlu0
        %v966 = vrot.slane %v534, 4
        %v967 = vsel %vm350, %v966, %v470
        %v968 = vrot.slane %v470, 4
        %v969 = vsel %vm350, %v534, %v968
        %v971 = vunpack.c.l.s4 1983009808
        %v972 = vunpack.c.0.s8 %v971
        %v973 = vperm.slane %v967, %v972
        %v975 = vunpack.c.l.s4 1983009808
        %v976 = vunpack.c.0.s8 %v975
        %v977 = vperm.slane %v969, %v976
        %v978 = vrot.slane %v566, 4
        %v979 = vsel %vm350, %v978, %v502
        %v980 = vrot.slane %v502, 4
        %v981 = vsel %vm350, %v566, %v980
        %v983 = vunpack.c.l.s4 1983009808
        %v984 = vunpack.c.0.s8 %v983
        %v985 = vperm.slane %v979, %v984
        %v987 = vunpack.c.l.s4 1983009808
        %v988 = vunpack.c.0.s8 %v987
        %v989 = vperm.slane %v981, %v988
        %v990 = vrot.slane %v662, 4
        %v991 = vsel %vm350, %v990, %v598
        %v992 = vrot.slane %v598, 4
        %v993 = vsel %vm350, %v662, %v992
        %v995 = vunpack.c.l.s4 1983009808
        %v996 = vunpack.c.0.s8 %v995
        %v997 = vperm.slane %v991, %v996
        %v999 = vunpack.c.l.s4 1983009808
        %v1000 = vunpack.c.0.s8 %v999
        %v1001 = vperm.slane %v993, %v1000
        %v1002 = vrot.slane %v694, 4
        %v1003 = vsel %vm350, %v1002, %v630
        %v1004 = vrot.slane %v630, 4
        %v1005 = vsel %vm350, %v694, %v1004
        %v1007 = vunpack.c.l.s4 1983009808
        %v1008 = vunpack.c.0.s8 %v1007
        %v1009 = vperm.slane %v1003, %v1008
        %v1011 = vunpack.c.l.s4 1983009808
        %v1012 = vunpack.c.0.s8 %v1011
        %v1013 = vperm.slane %v1005, %v1012
        %v1014 = vrot.slane %v985, 4
        %v1015 = vsel %vm350, %v1014, %v973
        %v1016 = vrot.slane %v973, 4
        %v1017 = vsel %vm350, %v985, %v1016
        %v1019 = vunpack.c.l.s4 1934713408
        %v1020 = vunpack.c.0.s8 %v1019
        %v1021 = vperm.slane %v1015, %v1020
        %v1023 = vunpack.c.l.s4 1934713408
        %v1024 = vunpack.c.0.s8 %v1023
        %v1025 = vperm.slane %v1017, %v1024
        %v1026 = vrot.slane %v989, 4
        %v1027 = vsel %vm350, %v1026, %v977
        %v1028 = vrot.slane %v977, 4
        %v1029 = vsel %vm350, %v989, %v1028
        %v1031 = vunpack.c.l.s4 1934713408
        %v1032 = vunpack.c.0.s8 %v1031
        %v1033 = vperm.slane %v1027, %v1032
        %v1035 = vunpack.c.l.s4 1934713408
        %v1036 = vunpack.c.0.s8 %v1035
        %v1037 = vperm.slane %v1029, %v1036
        %v1038 = vrot.slane %v1009, 4
        %v1039 = vsel %vm350, %v1038, %v997
        %v1040 = vrot.slane %v997, 4
        %v1041 = vsel %vm350, %v1009, %v1040
        %v1043 = vunpack.c.l.s4 1934713408
        %v1044 = vunpack.c.0.s8 %v1043
        %v1045 = vperm.slane %v1039, %v1044
        %v1047 = vunpack.c.l.s4 1934713408
        %v1048 = vunpack.c.0.s8 %v1047
        %v1049 = vperm.slane %v1041, %v1048
        %v1050 = vrot.slane %v1013, 4
        %v1051 = vsel %vm350, %v1050, %v1001
        %v1052 = vrot.slane %v1001, 4
        %v1053 = vsel %vm350, %v1013, %v1052
        %v1055 = vunpack.c.l.s4 1934713408
        %v1056 = vunpack.c.0.s8 %v1055
        %v1057 = vperm.slane %v1051, %v1056
        %v1059 = vunpack.c.l.s4 1934713408
        %v1060 = vunpack.c.0.s8 %v1059
        %v1061 = vperm.slane %v1053, %v1060
        %v1062 = vrot.slane %v1045, 4
        %v1063 = vsel %vm350, %v1062, %v1021
        %v1064 = vrot.slane %v1021, 4
        %v1065 = vsel %vm350, %v1045, %v1064
        %v1066 = vrot.slane %v1049, 4
        %v1067 = vsel %vm350, %v1066, %v1025
        %v1068 = vrot.slane %v1025, 4
        %v1069 = vsel %vm350, %v1049, %v1068
        %v1070 = vrot.slane %v1057, 4
        %v1071 = vsel %vm350, %v1070, %v1033
        %v1072 = vrot.slane %v1033, 4
        %v1073 = vsel %vm350, %v1057, %v1072
        %v1074 = vrot.slane %v1061, 4
        %v1075 = vsel %vm350, %v1074, %v1037
        %v1076 = vrot.slane %v1037, 4
        %v1077 = vsel %vm350, %v1061, %v1076
        %v1078 = vrot.slane %v790, 4
        %v1079 = vsel %vm350, %v1078, %v726
        %v1080 = vrot.slane %v726, 4
        %v1081 = vsel %vm350, %v790, %v1080
        %v1083 = vunpack.c.l.s4 1983009808
        %v1084 = vunpack.c.0.s8 %v1083
        %v1085 = vperm.slane %v1079, %v1084
        %v1087 = vunpack.c.l.s4 1983009808
        %v1088 = vunpack.c.0.s8 %v1087
        %v1089 = vperm.slane %v1081, %v1088
        %v1090 = vrot.slane %v822, 4
        %v1091 = vsel %vm350, %v1090, %v758
        %v1092 = vrot.slane %v758, 4
        %v1093 = vsel %vm350, %v822, %v1092
        %v1095 = vunpack.c.l.s4 1983009808
        %v1096 = vunpack.c.0.s8 %v1095
        %v1097 = vperm.slane %v1091, %v1096
        %v1099 = vunpack.c.l.s4 1983009808
        %v1100 = vunpack.c.0.s8 %v1099
        %v1101 = vperm.slane %v1093, %v1100
        %v1102 = vrot.slane %v918, 4
        %v1103 = vsel %vm350, %v1102, %v854
        %v1104 = vrot.slane %v854, 4
        %v1105 = vsel %vm350, %v918, %v1104
        %v1107 = vunpack.c.l.s4 1983009808
        %v1108 = vunpack.c.0.s8 %v1107
        %v1109 = vperm.slane %v1103, %v1108
        %v1111 = vunpack.c.l.s4 1983009808
        %v1112 = vunpack.c.0.s8 %v1111
        %v1113 = vperm.slane %v1105, %v1112
        %v1114 = vrot.slane %v950, 4
        %v1115 = vsel %vm350, %v1114, %v886
        %v1116 = vrot.slane %v886, 4
        %v1117 = vsel %vm350, %v950, %v1116
        %v1119 = vunpack.c.l.s4 1983009808
        %v1120 = vunpack.c.0.s8 %v1119
        %v1121 = vperm.slane %v1115, %v1120
        %v1123 = vunpack.c.l.s4 1983009808
        %v1124 = vunpack.c.0.s8 %v1123
        %v1125 = vperm.slane %v1117, %v1124
        %v1126 = vrot.slane %v1097, 4
        %v1127 = vsel %vm350, %v1126, %v1085
        %v1128 = vrot.slane %v1085, 4
        %v1129 = vsel %vm350, %v1097, %v1128
        %v1131 = vunpack.c.l.s4 1934713408
        %v1132 = vunpack.c.0.s8 %v1131
        %v1133 = vperm.slane %v1127, %v1132
        %v1135 = vunpack.c.l.s4 1934713408
        %v1136 = vunpack.c.0.s8 %v1135
        %v1137 = vperm.slane %v1129, %v1136
        %v1138 = vrot.slane %v1101, 4
        %v1139 = vsel %vm350, %v1138, %v1089
        %v1140 = vrot.slane %v1089, 4
        %v1141 = vsel %vm350, %v1101, %v1140
        %v1143 = vunpack.c.l.s4 1934713408
        %v1144 = vunpack.c.0.s8 %v1143
        %v1145 = vperm.slane %v1139, %v1144
        %v1147 = vunpack.c.l.s4 1934713408
        %v1148 = vunpack.c.0.s8 %v1147
        %v1149 = vperm.slane %v1141, %v1148
        %v1150 = vrot.slane %v1121, 4
        %v1151 = vsel %vm350, %v1150, %v1109
        %v1152 = vrot.slane %v1109, 4
        %v1153 = vsel %vm350, %v1121, %v1152
        %v1155 = vunpack.c.l.s4 1934713408
        %v1156 = vunpack.c.0.s8 %v1155
        %v1157 = vperm.slane %v1151, %v1156
        %v1159 = vunpack.c.l.s4 1934713408
        %v1160 = vunpack.c.0.s8 %v1159
        %v1161 = vperm.slane %v1153, %v1160
        %v1162 = vrot.slane %v1125, 4
        %v1163 = vsel %vm350, %v1162, %v1113
        %v1164 = vrot.slane %v1113, 4
        %v1165 = vsel %vm350, %v1125, %v1164
        %v1167 = vunpack.c.l.s4 1934713408
        %v1168 = vunpack.c.0.s8 %v1167
        %v1169 = vperm.slane %v1163, %v1168
        %v1171 = vunpack.c.l.s4 1934713408
        %v1172 = vunpack.c.0.s8 %v1171
        %v1173 = vperm.slane %v1165, %v1172
        %v1174 = vrot.slane %v1157, 4
        %v1175 = vsel %vm350, %v1174, %v1133
        %v1176 = vrot.slane %v1133, 4
        %v1177 = vsel %vm350, %v1157, %v1176
        %v1178 = vrot.slane %v1161, 4
        %v1179 = vsel %vm350, %v1178, %v1137
        %v1180 = vrot.slane %v1137, 4
        %v1181 = vsel %vm350, %v1161, %v1180
        %v1182 = vrot.slane %v1169, 4
        %v1183 = vsel %vm350, %v1182, %v1145
        %v1184 = vrot.slane %v1145, 4
        %v1185 = vsel %vm350, %v1169, %v1184
        %v1186 = vrot.slane %v1173, 4
        %v1187 = vsel %vm350, %v1186, %v1149
        %v1188 = vrot.slane %v1149, 4
        %v1189 = vsel %vm350, %v1173, %v1188
        %1190 = vxpose.xlu0.b32.start [1/16] %v269, 128
        %1191 = vxpose.xlu0.b32.cont [2/16] %v270, 128
        %1192 = vxpose.xlu0.b32.cont [3/16] 0.0, 128
        %1193 = vxpose.xlu0.b32.cont [4/16] 0.0, 128
        %1194 = vxpose.xlu0.b32.cont [5/16] 0.0, 128
        %1195 = vxpose.xlu0.b32.cont [6/16] 0.0, 128
        %1196 = vxpose.xlu0.b32.cont [7/16] 0.0, 128
        %1197 = vxpose.xlu0.b32.cont [8/16] 0.0, 128
        %1198 = vxpose.xlu0.b32.cont [9/16] 0.0, 128
        %1199 = vxpose.xlu0.b32.cont [10/16] 0.0, 128
        %1200 = vxpose.xlu0.b32.cont [11/16] 0.0, 128
        %1201 = vxpose.xlu0.b32.cont [12/16] 0.0, 128
        %1202 = vxpose.xlu0.b32.cont [13/16] 0.0, 128
        %1203 = vxpose.xlu0.b32.cont [14/16] 0.0, 128
        %1204 = vxpose.xlu0.b32.cont [15/16] 0.0, 128
        %1205 = vxpose.xlu0.b32.end [16/16] 0.0, 128
        %v1206 = vpop.trf.xlu0
        %v1207 = vpop.trf.xlu0
        %v1208 = vpop.trf.xlu0
        %v1209 = vpop.trf.xlu0
        %v1210 = vpop.trf.xlu0
        %v1211 = vpop.trf.xlu0
        %v1212 = vpop.trf.xlu0
        %v1213 = vpop.trf.xlu0
        %v1214 = vpop.trf.xlu0
        %v1215 = vpop.trf.xlu0
        %v1216 = vpop.trf.xlu0
        %v1217 = vpop.trf.xlu0
        %v1218 = vpop.trf.xlu0
        %v1219 = vpop.trf.xlu0
        %v1220 = vpop.trf.xlu0
        %v1221 = vpop.trf.xlu0
        %vm1222 = vcmask 130048
        %v1224 = vsel %vm1222, %v1206, 0
        %v1227 = vsel %vm1222, %v1207, 0
        %1229 = vmatpush.msra.mxu0 0.0
        %1230 = vmatpush.msra.mxu0 0.0
        %1231 = vmatpush.msra.mxu0 0.0
        %1232 = vmatpush.msra.mxu0 0.0
        %1233 = vmatpush.msra.mxu0 0.0
        %1234 = vmatpush.msra.mxu0 0.0
        %1235 = vmatpush.msra.mxu0 0.0
        %1236 = vmatpush.msra.mxu0 0.0
        %1237 = vmatpush.msra.mxu0 0.0
        %1238 = vmatpush.msra.mxu0 0.0
        %1239 = vmatpush.msra.mxu0 0.0
        %1240 = vmatpush.msra.mxu0 0.0
        %1241 = vmatpush.msra.mxu0 0.0
        %1242 = vmatpush.msra.mxu0 0.0
        %1243 = vmatpush.msra.mxu0 %v1175
        %1244 = vmatpush.msra.mxu0 %v1063
        %1245 = vmatmul.f32.gmra.mxu0 %v1224
        %v1246 = vpop.f32.mrf.mxu0
        %v1247 = vadd.f32 0.0, %v1246
        %1248 = vmatmul.f32.gmra.mxu0 %v1227
        %v1249 = vpop.f32.mrf.mxu0
        %v1250 = vadd.f32 0.0, %v1249
        %1251 = vdwg.mxu0
        %1252 = vxpose.xlu0.b32.start [1/16] %v271, 128
        %1253 = vxpose.xlu0.b32.cont [2/16] %v272, 128
        %1254 = vxpose.xlu0.b32.cont [3/16] 0.0, 128
        %1255 = vxpose.xlu0.b32.cont [4/16] 0.0, 128
        %1256 = vxpose.xlu0.b32.cont [5/16] 0.0, 128
        %1257 = vxpose.xlu0.b32.cont [6/16] 0.0, 128
        %1258 = vxpose.xlu0.b32.cont [7/16] 0.0, 128
        %1259 = vxpose.xlu0.b32.cont [8/16] 0.0, 128
        %1260 = vxpose.xlu0.b32.cont [9/16] 0.0, 128
        %1261 = vxpose.xlu0.b32.cont [10/16] 0.0, 128
        %1262 = vxpose.xlu0.b32.cont [11/16] 0.0, 128
        %1263 = vxpose.xlu0.b32.cont [12/16] 0.0, 128
        %1264 = vxpose.xlu0.b32.cont [13/16] 0.0, 128
        %1265 = vxpose.xlu0.b32.cont [14/16] 0.0, 128
        %1266 = vxpose.xlu0.b32.cont [15/16] 0.0, 128
        %1267 = vxpose.xlu0.b32.end [16/16] 0.0, 128
        %v1268 = vpop.trf.xlu0
        %v1269 = vpop.trf.xlu0
        %v1270 = vpop.trf.xlu0
        %v1271 = vpop.trf.xlu0
        %v1272 = vpop.trf.xlu0
        %v1273 = vpop.trf.xlu0
        %v1274 = vpop.trf.xlu0
        %v1275 = vpop.trf.xlu0
        %v1276 = vpop.trf.xlu0
        %v1277 = vpop.trf.xlu0
        %v1278 = vpop.trf.xlu0
        %v1279 = vpop.trf.xlu0
        %v1280 = vpop.trf.xlu0
        %v1281 = vpop.trf.xlu0
        %v1282 = vpop.trf.xlu0
        %v1283 = vpop.trf.xlu0
        %v1285 = vsel %vm1222, %v1268, 0
        %v1288 = vsel %vm1222, %v1269, 0
        %1290 = vmatpush.msra.mxu0 0.0
        %1291 = vmatpush.msra.mxu0 0.0
        %1292 = vmatpush.msra.mxu0 0.0
        %1293 = vmatpush.msra.mxu0 0.0
        %1294 = vmatpush.msra.mxu0 0.0
        %1295 = vmatpush.msra.mxu0 0.0
        %1296 = vmatpush.msra.mxu0 0.0
        %1297 = vmatpush.msra.mxu0 0.0
        %1298 = vmatpush.msra.mxu0 0.0
        %1299 = vmatpush.msra.mxu0 0.0
        %1300 = vmatpush.msra.mxu0 0.0
        %1301 = vmatpush.msra.mxu0 0.0
        %1302 = vmatpush.msra.mxu0 0.0
        %1303 = vmatpush.msra.mxu0 0.0
        %1304 = vmatpush.msra.mxu0 %v1177
        %1305 = vmatpush.msra.mxu0 %v1065
        %1306 = vmatmul.f32.gmra.mxu0 %v1285
        %v1307 = vpop.f32.mrf.mxu0
        %v1308 = vadd.f32 0.0, %v1307
        %1309 = vmatmul.f32.gmra.mxu0 %v1288
        %v1310 = vpop.f32.mrf.mxu0
        %v1311 = vadd.f32 0.0, %v1310
        %1312 = vdwg.mxu0
        %1313 = vxpose.xlu0.b32.start [1/16] %v273, 128
        %1314 = vxpose.xlu0.b32.cont [2/16] %v274, 128
        %1315 = vxpose.xlu0.b32.cont [3/16] 0.0, 128
        %1316 = vxpose.xlu0.b32.cont [4/16] 0.0, 128
        %1317 = vxpose.xlu0.b32.cont [5/16] 0.0, 128
        %1318 = vxpose.xlu0.b32.cont [6/16] 0.0, 128
        %1319 = vxpose.xlu0.b32.cont [7/16] 0.0, 128
        %1320 = vxpose.xlu0.b32.cont [8/16] 0.0, 128
        %1321 = vxpose.xlu0.b32.cont [9/16] 0.0, 128
        %1322 = vxpose.xlu0.b32.cont [10/16] 0.0, 128
        %1323 = vxpose.xlu0.b32.cont [11/16] 0.0, 128
        %1324 = vxpose.xlu0.b32.cont [12/16] 0.0, 128
        %1325 = vxpose.xlu0.b32.cont [13/16] 0.0, 128
        %1326 = vxpose.xlu0.b32.cont [14/16] 0.0, 128
        %1327 = vxpose.xlu0.b32.cont [15/16] 0.0, 128
        %1328 = vxpose.xlu0.b32.end [16/16] 0.0, 128
        %v1329 = vpop.trf.xlu0
        %v1330 = vpop.trf.xlu0
        %v1331 = vpop.trf.xlu0
        %v1332 = vpop.trf.xlu0
        %v1333 = vpop.trf.xlu0
        %v1334 = vpop.trf.xlu0
        %v1335 = vpop.trf.xlu0
        %v1336 = vpop.trf.xlu0
        %v1337 = vpop.trf.xlu0
        %v1338 = vpop.trf.xlu0
        %v1339 = vpop.trf.xlu0
        %v1340 = vpop.trf.xlu0
        %v1341 = vpop.trf.xlu0
        %v1342 = vpop.trf.xlu0
        %v1343 = vpop.trf.xlu0
        %v1344 = vpop.trf.xlu0
        %v1346 = vsel %vm1222, %v1329, 0
        %v1349 = vsel %vm1222, %v1330, 0
        %1351 = vmatpush.msra.mxu0 0.0
        %1352 = vmatpush.msra.mxu0 0.0
        %1353 = vmatpush.msra.mxu0 0.0
        %1354 = vmatpush.msra.mxu0 0.0
        %1355 = vmatpush.msra.mxu0 0.0
        %1356 = vmatpush.msra.mxu0 0.0
        %1357 = vmatpush.msra.mxu0 0.0
        %1358 = vmatpush.msra.mxu0 0.0
        %1359 = vmatpush.msra.mxu0 0.0
        %1360 = vmatpush.msra.mxu0 0.0
        %1361 = vmatpush.msra.mxu0 0.0
        %1362 = vmatpush.msra.mxu0 0.0
        %1363 = vmatpush.msra.mxu0 0.0
        %1364 = vmatpush.msra.mxu0 0.0
        %1365 = vmatpush.msra.mxu0 %v1179
        %1366 = vmatpush.msra.mxu0 %v1067
        %1367 = vmatmul.f32.gmra.mxu0 %v1346
        %v1368 = vpop.f32.mrf.mxu0
        %v1369 = vadd.f32 0.0, %v1368
        %1370 = vmatmul.f32.gmra.mxu0 %v1349
        %v1371 = vpop.f32.mrf.mxu0
        %v1372 = vadd.f32 0.0, %v1371
        %1373 = vdwg.mxu0
        %1374 = vxpose.xlu0.b32.start [1/16] %v275, 128
        %1375 = vxpose.xlu0.b32.cont [2/16] %v276, 128
        %1376 = vxpose.xlu0.b32.cont [3/16] 0.0, 128
        %1377 = vxpose.xlu0.b32.cont [4/16] 0.0, 128
        %1378 = vxpose.xlu0.b32.cont [5/16] 0.0, 128
        %1379 = vxpose.xlu0.b32.cont [6/16] 0.0, 128
        %1380 = vxpose.xlu0.b32.cont [7/16] 0.0, 128
        %1381 = vxpose.xlu0.b32.cont [8/16] 0.0, 128
        %1382 = vxpose.xlu0.b32.cont [9/16] 0.0, 128
        %1383 = vxpose.xlu0.b32.cont [10/16] 0.0, 128
        %1384 = vxpose.xlu0.b32.cont [11/16] 0.0, 128
        %1385 = vxpose.xlu0.b32.cont [12/16] 0.0, 128
        %1386 = vxpose.xlu0.b32.cont [13/16] 0.0, 128
        %1387 = vxpose.xlu0.b32.cont [14/16] 0.0, 128
        %1388 = vxpose.xlu0.b32.cont [15/16] 0.0, 128
        %1389 = vxpose.xlu0.b32.end [16/16] 0.0, 128
        %v1390 = vpop.trf.xlu0
        %v1391 = vpop.trf.xlu0
        %v1392 = vpop.trf.xlu0
        %v1393 = vpop.trf.xlu0
        %v1394 = vpop.trf.xlu0
        %v1395 = vpop.trf.xlu0
        %v1396 = vpop.trf.xlu0
        %v1397 = vpop.trf.xlu0
        %v1398 = vpop.trf.xlu0
        %v1399 = vpop.trf.xlu0
        %v1400 = vpop.trf.xlu0
        %v1401 = vpop.trf.xlu0
        %v1402 = vpop.trf.xlu0
        %v1403 = vpop.trf.xlu0
        %v1404 = vpop.trf.xlu0
        %v1405 = vpop.trf.xlu0
        %v1407 = vsel %vm1222, %v1390, 0
        %v1410 = vsel %vm1222, %v1391, 0
        %1412 = vmatpush.msra.mxu0 0.0
        %1413 = vmatpush.msra.mxu0 0.0
        %1414 = vmatpush.msra.mxu0 0.0
        %1415 = vmatpush.msra.mxu0 0.0
        %1416 = vmatpush.msra.mxu0 0.0
        %1417 = vmatpush.msra.mxu0 0.0
        %1418 = vmatpush.msra.mxu0 0.0
        %1419 = vmatpush.msra.mxu0 0.0
        %1420 = vmatpush.msra.mxu0 0.0
        %1421 = vmatpush.msra.mxu0 0.0
        %1422 = vmatpush.msra.mxu0 0.0
        %1423 = vmatpush.msra.mxu0 0.0
        %1424 = vmatpush.msra.mxu0 0.0
        %1425 = vmatpush.msra.mxu0 0.0
        %1426 = vmatpush.msra.mxu0 %v1181
        %1427 = vmatpush.msra.mxu0 %v1069
        %1428 = vmatmul.f32.gmra.mxu0 %v1407
        %v1429 = vpop.f32.mrf.mxu0
        %v1430 = vadd.f32 0.0, %v1429
        %1431 = vmatmul.f32.gmra.mxu0 %v1410
        %v1432 = vpop.f32.mrf.mxu0
        %v1433 = vadd.f32 0.0, %v1432
        %1434 = vdwg.mxu0
        %1435 = vxpose.xlu0.b32.start [1/16] %v277, 128
        %1436 = vxpose.xlu0.b32.cont [2/16] %v278, 128
        %1437 = vxpose.xlu0.b32.cont [3/16] 0.0, 128
        %1438 = vxpose.xlu0.b32.cont [4/16] 0.0, 128
        %1439 = vxpose.xlu0.b32.cont [5/16] 0.0, 128
        %1440 = vxpose.xlu0.b32.cont [6/16] 0.0, 128
        %1441 = vxpose.xlu0.b32.cont [7/16] 0.0, 128
        %1442 = vxpose.xlu0.b32.cont [8/16] 0.0, 128
        %1443 = vxpose.xlu0.b32.cont [9/16] 0.0, 128
        %1444 = vxpose.xlu0.b32.cont [10/16] 0.0, 128
        %1445 = vxpose.xlu0.b32.cont [11/16] 0.0, 128
        %1446 = vxpose.xlu0.b32.cont [12/16] 0.0, 128
        %1447 = vxpose.xlu0.b32.cont [13/16] 0.0, 128
        %1448 = vxpose.xlu0.b32.cont [14/16] 0.0, 128
        %1449 = vxpose.xlu0.b32.cont [15/16] 0.0, 128
        %1450 = vxpose.xlu0.b32.end [16/16] 0.0, 128
        %v1451 = vpop.trf.xlu0
        %v1452 = vpop.trf.xlu0
        %v1453 = vpop.trf.xlu0
        %v1454 = vpop.trf.xlu0
        %v1455 = vpop.trf.xlu0
        %v1456 = vpop.trf.xlu0
        %v1457 = vpop.trf.xlu0
        %v1458 = vpop.trf.xlu0
        %v1459 = vpop.trf.xlu0
        %v1460 = vpop.trf.xlu0
        %v1461 = vpop.trf.xlu0
        %v1462 = vpop.trf.xlu0
        %v1463 = vpop.trf.xlu0
        %v1464 = vpop.trf.xlu0
        %v1465 = vpop.trf.xlu0
        %v1466 = vpop.trf.xlu0
        %v1468 = vsel %vm1222, %v1451, 0
        %v1471 = vsel %vm1222, %v1452, 0
        %1473 = vmatpush.msra.mxu0 0.0
        %1474 = vmatpush.msra.mxu0 0.0
        %1475 = vmatpush.msra.mxu0 0.0
        %1476 = vmatpush.msra.mxu0 0.0
        %1477 = vmatpush.msra.mxu0 0.0
        %1478 = vmatpush.msra.mxu0 0.0
        %1479 = vmatpush.msra.mxu0 0.0
        %1480 = vmatpush.msra.mxu0 0.0
        %1481 = vmatpush.msra.mxu0 0.0
        %1482 = vmatpush.msra.mxu0 0.0
        %1483 = vmatpush.msra.mxu0 0.0
        %1484 = vmatpush.msra.mxu0 0.0
        %1485 = vmatpush.msra.mxu0 0.0
        %1486 = vmatpush.msra.mxu0 0.0
        %1487 = vmatpush.msra.mxu0 %v1183
        %1488 = vmatpush.msra.mxu0 %v1071
        %1489 = vmatmul.f32.gmra.mxu0 %v1468
        %v1490 = vpop.f32.mrf.mxu0
        %v1491 = vadd.f32 0.0, %v1490
        %1492 = vmatmul.f32.gmra.mxu0 %v1471
        %v1493 = vpop.f32.mrf.mxu0
        %v1494 = vadd.f32 0.0, %v1493
        %1495 = vdwg.mxu0
        %1496 = vxpose.xlu0.b32.start [1/16] %v279, 128
        %1497 = vxpose.xlu0.b32.cont [2/16] %v280, 128
        %1498 = vxpose.xlu0.b32.cont [3/16] 0.0, 128
        %1499 = vxpose.xlu0.b32.cont [4/16] 0.0, 128
        %1500 = vxpose.xlu0.b32.cont [5/16] 0.0, 128
        %1501 = vxpose.xlu0.b32.cont [6/16] 0.0, 128
        %1502 = vxpose.xlu0.b32.cont [7/16] 0.0, 128
        %1503 = vxpose.xlu0.b32.cont [8/16] 0.0, 128
        %1504 = vxpose.xlu0.b32.cont [9/16] 0.0, 128
        %1505 = vxpose.xlu0.b32.cont [10/16] 0.0, 128
        %1506 = vxpose.xlu0.b32.cont [11/16] 0.0, 128
        %1507 = vxpose.xlu0.b32.cont [12/16] 0.0, 128
        %1508 = vxpose.xlu0.b32.cont [13/16] 0.0, 128
        %1509 = vxpose.xlu0.b32.cont [14/16] 0.0, 128
        %1510 = vxpose.xlu0.b32.cont [15/16] 0.0, 128
        %1511 = vxpose.xlu0.b32.end [16/16] 0.0, 128
        %v1512 = vpop.trf.xlu0
        %v1513 = vpop.trf.xlu0
        %v1514 = vpop.trf.xlu0
        %v1515 = vpop.trf.xlu0
        %v1516 = vpop.trf.xlu0
        %v1517 = vpop.trf.xlu0
        %v1518 = vpop.trf.xlu0
        %v1519 = vpop.trf.xlu0
        %v1520 = vpop.trf.xlu0
        %v1521 = vpop.trf.xlu0
        %v1522 = vpop.trf.xlu0
        %v1523 = vpop.trf.xlu0
        %v1524 = vpop.trf.xlu0
        %v1525 = vpop.trf.xlu0
        %v1526 = vpop.trf.xlu0
        %v1527 = vpop.trf.xlu0
        %v1529 = vsel %vm1222, %v1512, 0
        %v1532 = vsel %vm1222, %v1513, 0
        %1534 = vmatpush.msra.mxu0 0.0
        %1535 = vmatpush.msra.mxu0 0.0
        %1536 = vmatpush.msra.mxu0 0.0
        %1537 = vmatpush.msra.mxu0 0.0
        %1538 = vmatpush.msra.mxu0 0.0
        %1539 = vmatpush.msra.mxu0 0.0
        %1540 = vmatpush.msra.mxu0 0.0
        %1541 = vmatpush.msra.mxu0 0.0
        %1542 = vmatpush.msra.mxu0 0.0
        %1543 = vmatpush.msra.mxu0 0.0
        %1544 = vmatpush.msra.mxu0 0.0
        %1545 = vmatpush.msra.mxu0 0.0
        %1546 = vmatpush.msra.mxu0 0.0
        %1547 = vmatpush.msra.mxu0 0.0
        %1548 = vmatpush.msra.mxu0 %v1185
        %1549 = vmatpush.msra.mxu0 %v1073
        %1550 = vmatmul.f32.gmra.mxu0 %v1529
        %v1551 = vpop.f32.mrf.mxu0
        %v1552 = vadd.f32 0.0, %v1551
        %1553 = vmatmul.f32.gmra.mxu0 %v1532
        %v1554 = vpop.f32.mrf.mxu0
        %v1555 = vadd.f32 0.0, %v1554
        %1556 = vdwg.mxu0
        %1557 = vxpose.xlu0.b32.start [1/16] %v281, 128
        %1558 = vxpose.xlu0.b32.cont [2/16] %v282, 128
        %1559 = vxpose.xlu0.b32.cont [3/16] 0.0, 128
        %1560 = vxpose.xlu0.b32.cont [4/16] 0.0, 128
        %1561 = vxpose.xlu0.b32.cont [5/16] 0.0, 128
        %1562 = vxpose.xlu0.b32.cont [6/16] 0.0, 128
        %1563 = vxpose.xlu0.b32.cont [7/16] 0.0, 128
        %1564 = vxpose.xlu0.b32.cont [8/16] 0.0, 128
        %1565 = vxpose.xlu0.b32.cont [9/16] 0.0, 128
        %1566 = vxpose.xlu0.b32.cont [10/16] 0.0, 128
        %1567 = vxpose.xlu0.b32.cont [11/16] 0.0, 128
        %1568 = vxpose.xlu0.b32.cont [12/16] 0.0, 128
        %1569 = vxpose.xlu0.b32.cont [13/16] 0.0, 128
        %1570 = vxpose.xlu0.b32.cont [14/16] 0.0, 128
        %1571 = vxpose.xlu0.b32.cont [15/16] 0.0, 128
        %1572 = vxpose.xlu0.b32.end [16/16] 0.0, 128
        %v1573 = vpop.trf.xlu0
        %v1574 = vpop.trf.xlu0
        %v1575 = vpop.trf.xlu0
        %v1576 = vpop.trf.xlu0
        %v1577 = vpop.trf.xlu0
        %v1578 = vpop.trf.xlu0
        %v1579 = vpop.trf.xlu0
        %v1580 = vpop.trf.xlu0
        %v1581 = vpop.trf.xlu0
        %v1582 = vpop.trf.xlu0
        %v1583 = vpop.trf.xlu0
        %v1584 = vpop.trf.xlu0
        %v1585 = vpop.trf.xlu0
        %v1586 = vpop.trf.xlu0
        %v1587 = vpop.trf.xlu0
        %v1588 = vpop.trf.xlu0
        %v1590 = vsel %vm1222, %v1573, 0
        %v1593 = vsel %vm1222, %v1574, 0
        %1595 = vmatpush.msra.mxu0 0.0
        %1596 = vmatpush.msra.mxu0 0.0
        %1597 = vmatpush.msra.mxu0 0.0
        %1598 = vmatpush.msra.mxu0 0.0
        %1599 = vmatpush.msra.mxu0 0.0
        %1600 = vmatpush.msra.mxu0 0.0
        %1601 = vmatpush.msra.mxu0 0.0
        %1602 = vmatpush.msra.mxu0 0.0
        %1603 = vmatpush.msra.mxu0 0.0
        %1604 = vmatpush.msra.mxu0 0.0
        %1605 = vmatpush.msra.mxu0 0.0
        %1606 = vmatpush.msra.mxu0 0.0
        %1607 = vmatpush.msra.mxu0 0.0
        %1608 = vmatpush.msra.mxu0 0.0
        %1609 = vmatpush.msra.mxu0 %v1187
        %1610 = vmatpush.msra.mxu0 %v1075
        %1611 = vmatmul.f32.gmra.mxu0 %v1590
        %v1612 = vpop.f32.mrf.mxu0
        %v1613 = vadd.f32 0.0, %v1612
        %1614 = vmatmul.f32.gmra.mxu0 %v1593
        %v1615 = vpop.f32.mrf.mxu0
        %v1616 = vadd.f32 0.0, %v1615
        %1617 = vdwg.mxu0
        %1618 = vxpose.xlu0.b32.start [1/16] %v283, 128
        %1619 = vxpose.xlu0.b32.cont [2/16] %v284, 128
        %1620 = vxpose.xlu0.b32.cont [3/16] 0.0, 128
        %1621 = vxpose.xlu0.b32.cont [4/16] 0.0, 128
        %1622 = vxpose.xlu0.b32.cont [5/16] 0.0, 128
        %1623 = vxpose.xlu0.b32.cont [6/16] 0.0, 128
        %1624 = vxpose.xlu0.b32.cont [7/16] 0.0, 128
        %1625 = vxpose.xlu0.b32.cont [8/16] 0.0, 128
        %1626 = vxpose.xlu0.b32.cont [9/16] 0.0, 128
        %1627 = vxpose.xlu0.b32.cont [10/16] 0.0, 128
        %1628 = vxpose.xlu0.b32.cont [11/16] 0.0, 128
        %1629 = vxpose.xlu0.b32.cont [12/16] 0.0, 128
        %1630 = vxpose.xlu0.b32.cont [13/16] 0.0, 128
        %1631 = vxpose.xlu0.b32.cont [14/16] 0.0, 128
        %1632 = vxpose.xlu0.b32.cont [15/16] 0.0, 128
        %1633 = vxpose.xlu0.b32.end [16/16] 0.0, 128
        %v1634 = vpop.trf.xlu0
        %v1635 = vpop.trf.xlu0
        %v1636 = vpop.trf.xlu0
        %v1637 = vpop.trf.xlu0
        %v1638 = vpop.trf.xlu0
        %v1639 = vpop.trf.xlu0
        %v1640 = vpop.trf.xlu0
        %v1641 = vpop.trf.xlu0
        %v1642 = vpop.trf.xlu0
        %v1643 = vpop.trf.xlu0
        %v1644 = vpop.trf.xlu0
        %v1645 = vpop.trf.xlu0
        %v1646 = vpop.trf.xlu0
        %v1647 = vpop.trf.xlu0
        %v1648 = vpop.trf.xlu0
        %v1649 = vpop.trf.xlu0
        %v1651 = vsel %vm1222, %v1634, 0
        %v1654 = vsel %vm1222, %v1635, 0
        %1656 = vmatpush.msra.mxu0 0.0
        %1657 = vmatpush.msra.mxu0 0.0
        %1658 = vmatpush.msra.mxu0 0.0
        %1659 = vmatpush.msra.mxu0 0.0
        %1660 = vmatpush.msra.mxu0 0.0
        %1661 = vmatpush.msra.mxu0 0.0
        %1662 = vmatpush.msra.mxu0 0.0
        %1663 = vmatpush.msra.mxu0 0.0
        %1664 = vmatpush.msra.mxu0 0.0
        %1665 = vmatpush.msra.mxu0 0.0
        %1666 = vmatpush.msra.mxu0 0.0
        %1667 = vmatpush.msra.mxu0 0.0
        %1668 = vmatpush.msra.mxu0 0.0
        %1669 = vmatpush.msra.mxu0 0.0
        %1670 = vmatpush.msra.mxu0 %v1189
        %1671 = vmatpush.msra.mxu0 %v1077
        %1672 = vmatmul.f32.gmra.mxu0 %v1651
        %v1673 = vpop.f32.mrf.mxu0
        %v1674 = vadd.f32 0.0, %v1673
        %1675 = vmatmul.f32.gmra.mxu0 %v1654
        %v1676 = vpop.f32.mrf.mxu0
        %v1677 = vadd.f32 0.0, %v1676
        %1678 = vdwg.mxu0
        %1679 = vxpose.xlu0.b32.start [1/16] %v1247, 128
        %1680 = vxpose.xlu0.b32.cont [2/16] %v1250, 128
        %1681 = vxpose.xlu0.b32.cont [3/16] 0.0, 128
        %1682 = vxpose.xlu0.b32.cont [4/16] 0.0, 128
        %1683 = vxpose.xlu0.b32.cont [5/16] 0.0, 128
        %1684 = vxpose.xlu0.b32.cont [6/16] 0.0, 128
        %1685 = vxpose.xlu0.b32.cont [7/16] 0.0, 128
        %1686 = vxpose.xlu0.b32.cont [8/16] 0.0, 128
        %1687 = vxpose.xlu0.b32.cont [9/16] 0.0, 128
        %1688 = vxpose.xlu0.b32.cont [10/16] 0.0, 128
        %1689 = vxpose.xlu0.b32.cont [11/16] 0.0, 128
        %1690 = vxpose.xlu0.b32.cont [12/16] 0.0, 128
        %1691 = vxpose.xlu0.b32.cont [13/16] 0.0, 128
        %1692 = vxpose.xlu0.b32.cont [14/16] 0.0, 128
        %1693 = vxpose.xlu0.b32.cont [15/16] 0.0, 128
        %1694 = vxpose.xlu0.b32.end [16/16] 0.0, 128
        %v1695 = vpop.trf.xlu0
        %v1696 = vpop.trf.xlu0
        %v1697 = vpop.trf.xlu0
        %v1698 = vpop.trf.xlu0
        %v1699 = vpop.trf.xlu0
        %v1700 = vpop.trf.xlu0
        %v1701 = vpop.trf.xlu0
        %v1702 = vpop.trf.xlu0
        %v1703 = vpop.trf.xlu0
        %v1704 = vpop.trf.xlu0
        %v1705 = vpop.trf.xlu0
        %v1706 = vpop.trf.xlu0
        %v1707 = vpop.trf.xlu0
        %v1708 = vpop.trf.xlu0
        %v1709 = vpop.trf.xlu0
        %v1710 = vpop.trf.xlu0
        %1711 = vxpose.xlu0.b32.start [1/16] %v1308, 128
        %1712 = vxpose.xlu0.b32.cont [2/16] %v1311, 128
        %1713 = vxpose.xlu0.b32.cont [3/16] 0.0, 128
        %1714 = vxpose.xlu0.b32.cont [4/16] 0.0, 128
        %1715 = vxpose.xlu0.b32.cont [5/16] 0.0, 128
        %1716 = vxpose.xlu0.b32.cont [6/16] 0.0, 128
        %1717 = vxpose.xlu0.b32.cont [7/16] 0.0, 128
        %1718 = vxpose.xlu0.b32.cont [8/16] 0.0, 128
        %1719 = vxpose.xlu0.b32.cont [9/16] 0.0, 128
        %1720 = vxpose.xlu0.b32.cont [10/16] 0.0, 128
        %1721 = vxpose.xlu0.b32.cont [11/16] 0.0, 128
        %1722 = vxpose.xlu0.b32.cont [12/16] 0.0, 128
        %1723 = vxpose.xlu0.b32.cont [13/16] 0.0, 128
        %1724 = vxpose.xlu0.b32.cont [14/16] 0.0, 128
        %1725 = vxpose.xlu0.b32.cont [15/16] 0.0, 128
        %1726 = vxpose.xlu0.b32.end [16/16] 0.0, 128
        %v1727 = vpop.trf.xlu0
        %v1728 = vpop.trf.xlu0
        %v1729 = vpop.trf.xlu0
        %v1730 = vpop.trf.xlu0
        %v1731 = vpop.trf.xlu0
        %v1732 = vpop.trf.xlu0
        %v1733 = vpop.trf.xlu0
        %v1734 = vpop.trf.xlu0
        %v1735 = vpop.trf.xlu0
        %v1736 = vpop.trf.xlu0
        %v1737 = vpop.trf.xlu0
        %v1738 = vpop.trf.xlu0
        %v1739 = vpop.trf.xlu0
        %v1740 = vpop.trf.xlu0
        %v1741 = vpop.trf.xlu0
        %v1742 = vpop.trf.xlu0
        %1743 = vxpose.xlu0.b32.start [1/16] %v1369, 128
        %1744 = vxpose.xlu0.b32.cont [2/16] %v1372, 128
        %1745 = vxpose.xlu0.b32.cont [3/16] 0.0, 128
        %1746 = vxpose.xlu0.b32.cont [4/16] 0.0, 128
        %1747 = vxpose.xlu0.b32.cont [5/16] 0.0, 128
        %1748 = vxpose.xlu0.b32.cont [6/16] 0.0, 128
        %1749 = vxpose.xlu0.b32.cont [7/16] 0.0, 128
        %1750 = vxpose.xlu0.b32.cont [8/16] 0.0, 128
        %1751 = vxpose.xlu0.b32.cont [9/16] 0.0, 128
        %1752 = vxpose.xlu0.b32.cont [10/16] 0.0, 128
        %1753 = vxpose.xlu0.b32.cont [11/16] 0.0, 128
        %1754 = vxpose.xlu0.b32.cont [12/16] 0.0, 128
        %1755 = vxpose.xlu0.b32.cont [13/16] 0.0, 128
        %1756 = vxpose.xlu0.b32.cont [14/16] 0.0, 128
        %1757 = vxpose.xlu0.b32.cont [15/16] 0.0, 128
        %1758 = vxpose.xlu0.b32.end [16/16] 0.0, 128
        %v1759 = vpop.trf.xlu0
        %v1760 = vpop.trf.xlu0
        %v1761 = vpop.trf.xlu0
        %v1762 = vpop.trf.xlu0
        %v1763 = vpop.trf.xlu0
        %v1764 = vpop.trf.xlu0
        %v1765 = vpop.trf.xlu0
        %v1766 = vpop.trf.xlu0
        %v1767 = vpop.trf.xlu0
        %v1768 = vpop.trf.xlu0
        %v1769 = vpop.trf.xlu0
        %v1770 = vpop.trf.xlu0
        %v1771 = vpop.trf.xlu0
        %v1772 = vpop.trf.xlu0
        %v1773 = vpop.trf.xlu0
        %v1774 = vpop.trf.xlu0
        %1775 = vxpose.xlu0.b32.start [1/16] %v1430, 128
        %1776 = vxpose.xlu0.b32.cont [2/16] %v1433, 128
        %1777 = vxpose.xlu0.b32.cont [3/16] 0.0, 128
        %1778 = vxpose.xlu0.b32.cont [4/16] 0.0, 128
        %1779 = vxpose.xlu0.b32.cont [5/16] 0.0, 128
        %1780 = vxpose.xlu0.b32.cont [6/16] 0.0, 128
        %1781 = vxpose.xlu0.b32.cont [7/16] 0.0, 128
        %1782 = vxpose.xlu0.b32.cont [8/16] 0.0, 128
        %1783 = vxpose.xlu0.b32.cont [9/16] 0.0, 128
        %1784 = vxpose.xlu0.b32.cont [10/16] 0.0, 128
        %1785 = vxpose.xlu0.b32.cont [11/16] 0.0, 128
        %1786 = vxpose.xlu0.b32.cont [12/16] 0.0, 128
        %1787 = vxpose.xlu0.b32.cont [13/16] 0.0, 128
        %1788 = vxpose.xlu0.b32.cont [14/16] 0.0, 128
        %1789 = vxpose.xlu0.b32.cont [15/16] 0.0, 128
        %1790 = vxpose.xlu0.b32.end [16/16] 0.0, 128
        %v1791 = vpop.trf.xlu0
        %v1792 = vpop.trf.xlu0
        %v1793 = vpop.trf.xlu0
        %v1794 = vpop.trf.xlu0
        %v1795 = vpop.trf.xlu0
        %v1796 = vpop.trf.xlu0
        %v1797 = vpop.trf.xlu0
        %v1798 = vpop.trf.xlu0
        %v1799 = vpop.trf.xlu0
        %v1800 = vpop.trf.xlu0
        %v1801 = vpop.trf.xlu0
        %v1802 = vpop.trf.xlu0
        %v1803 = vpop.trf.xlu0
        %v1804 = vpop.trf.xlu0
        %v1805 = vpop.trf.xlu0
        %v1806 = vpop.trf.xlu0
        %1807 = vxpose.xlu0.b32.start [1/16] %v1491, 128
        %1808 = vxpose.xlu0.b32.cont [2/16] %v1494, 128
        %1809 = vxpose.xlu0.b32.cont [3/16] 0.0, 128
        %1810 = vxpose.xlu0.b32.cont [4/16] 0.0, 128
        %1811 = vxpose.xlu0.b32.cont [5/16] 0.0, 128
        %1812 = vxpose.xlu0.b32.cont [6/16] 0.0, 128
        %1813 = vxpose.xlu0.b32.cont [7/16] 0.0, 128
        %1814 = vxpose.xlu0.b32.cont [8/16] 0.0, 128
        %1815 = vxpose.xlu0.b32.cont [9/16] 0.0, 128
        %1816 = vxpose.xlu0.b32.cont [10/16] 0.0, 128
        %1817 = vxpose.xlu0.b32.cont [11/16] 0.0, 128
        %1818 = vxpose.xlu0.b32.cont [12/16] 0.0, 128
        %1819 = vxpose.xlu0.b32.cont [13/16] 0.0, 128
        %1820 = vxpose.xlu0.b32.cont [14/16] 0.0, 128
        %1821 = vxpose.xlu0.b32.cont [15/16] 0.0, 128
        %1822 = vxpose.xlu0.b32.end [16/16] 0.0, 128
        %v1823 = vpop.trf.xlu0
        %v1824 = vpop.trf.xlu0
        %v1825 = vpop.trf.xlu0
        %v1826 = vpop.trf.xlu0
        %v1827 = vpop.trf.xlu0
        %v1828 = vpop.trf.xlu0
        %v1829 = vpop.trf.xlu0
        %v1830 = vpop.trf.xlu0
        %v1831 = vpop.trf.xlu0
        %v1832 = vpop.trf.xlu0
        %v1833 = vpop.trf.xlu0
        %v1834 = vpop.trf.xlu0
        %v1835 = vpop.trf.xlu0
        %v1836 = vpop.trf.xlu0
        %v1837 = vpop.trf.xlu0
        %v1838 = vpop.trf.xlu0
        %1839 = vxpose.xlu0.b32.start [1/16] %v1552, 128
        %1840 = vxpose.xlu0.b32.cont [2/16] %v1555, 128
        %1841 = vxpose.xlu0.b32.cont [3/16] 0.0, 128
        %1842 = vxpose.xlu0.b32.cont [4/16] 0.0, 128
        %1843 = vxpose.xlu0.b32.cont [5/16] 0.0, 128
        %1844 = vxpose.xlu0.b32.cont [6/16] 0.0, 128
        %1845 = vxpose.xlu0.b32.cont [7/16] 0.0, 128
        %1846 = vxpose.xlu0.b32.cont [8/16] 0.0, 128
        %1847 = vxpose.xlu0.b32.cont [9/16] 0.0, 128
        %1848 = vxpose.xlu0.b32.cont [10/16] 0.0, 128
        %1849 = vxpose.xlu0.b32.cont [11/16] 0.0, 128
        %1850 = vxpose.xlu0.b32.cont [12/16] 0.0, 128
        %1851 = vxpose.xlu0.b32.cont [13/16] 0.0, 128
        %1852 = vxpose.xlu0.b32.cont [14/16] 0.0, 128
        %1853 = vxpose.xlu0.b32.cont [15/16] 0.0, 128
        %1854 = vxpose.xlu0.b32.end [16/16] 0.0, 128
        %v1855 = vpop.trf.xlu0
        %v1856 = vpop.trf.xlu0
        %v1857 = vpop.trf.xlu0
        %v1858 = vpop.trf.xlu0
        %v1859 = vpop.trf.xlu0
        %v1860 = vpop.trf.xlu0
        %v1861 = vpop.trf.xlu0
        %v1862 = vpop.trf.xlu0
        %v1863 = vpop.trf.xlu0
        %v1864 = vpop.trf.xlu0
        %v1865 = vpop.trf.xlu0
        %v1866 = vpop.trf.xlu0
        %v1867 = vpop.trf.xlu0
        %v1868 = vpop.trf.xlu0
        %v1869 = vpop.trf.xlu0
        %v1870 = vpop.trf.xlu0
        %1871 = vxpose.xlu0.b32.start [1/16] %v1613, 128
        %1872 = vxpose.xlu0.b32.cont [2/16] %v1616, 128
        %1873 = vxpose.xlu0.b32.cont [3/16] 0.0, 128
        %1874 = vxpose.xlu0.b32.cont [4/16] 0.0, 128
        %1875 = vxpose.xlu0.b32.cont [5/16] 0.0, 128
        %1876 = vxpose.xlu0.b32.cont [6/16] 0.0, 128
        %1877 = vxpose.xlu0.b32.cont [7/16] 0.0, 128
        %1878 = vxpose.xlu0.b32.cont [8/16] 0.0, 128
        %1879 = vxpose.xlu0.b32.cont [9/16] 0.0, 128
        %1880 = vxpose.xlu0.b32.cont [10/16] 0.0, 128
        %1881 = vxpose.xlu0.b32.cont [11/16] 0.0, 128
        %1882 = vxpose.xlu0.b32.cont [12/16] 0.0, 128
        %1883 = vxpose.xlu0.b32.cont [13/16] 0.0, 128
        %1884 = vxpose.xlu0.b32.cont [14/16] 0.0, 128
        %1885 = vxpose.xlu0.b32.cont [15/16] 0.0, 128
        %1886 = vxpose.xlu0.b32.end [16/16] 0.0, 128
        %v1887 = vpop.trf.xlu0
        %v1888 = vpop.trf.xlu0
        %v1889 = vpop.trf.xlu0
        %v1890 = vpop.trf.xlu0
        %v1891 = vpop.trf.xlu0
        %v1892 = vpop.trf.xlu0
        %v1893 = vpop.trf.xlu0
        %v1894 = vpop.trf.xlu0
        %v1895 = vpop.trf.xlu0
        %v1896 = vpop.trf.xlu0
        %v1897 = vpop.trf.xlu0
        %v1898 = vpop.trf.xlu0
        %v1899 = vpop.trf.xlu0
        %v1900 = vpop.trf.xlu0
        %v1901 = vpop.trf.xlu0
        %v1902 = vpop.trf.xlu0
        %1903 = vxpose.xlu0.b32.start [1/16] %v1674, 128
        %1904 = vxpose.xlu0.b32.cont [2/16] %v1677, 128
        %1905 = vxpose.xlu0.b32.cont [3/16] 0.0, 128
        %1906 = vxpose.xlu0.b32.cont [4/16] 0.0, 128
        %1907 = vxpose.xlu0.b32.cont [5/16] 0.0, 128
        %1908 = vxpose.xlu0.b32.cont [6/16] 0.0, 128
        %1909 = vxpose.xlu0.b32.cont [7/16] 0.0, 128
        %1910 = vxpose.xlu0.b32.cont [8/16] 0.0, 128
        %1911 = vxpose.xlu0.b32.cont [9/16] 0.0, 128
        %1912 = vxpose.xlu0.b32.cont [10/16] 0.0, 128
        %1913 = vxpose.xlu0.b32.cont [11/16] 0.0, 128
        %1914 = vxpose.xlu0.b32.cont [12/16] 0.0, 128
        %1915 = vxpose.xlu0.b32.cont [13/16] 0.0, 128
        %1916 = vxpose.xlu0.b32.cont [14/16] 0.0, 128
        %1917 = vxpose.xlu0.b32.cont [15/16] 0.0, 128
        %1918 = vxpose.xlu0.b32.end [16/16] 0.0, 128
        %v1919 = vpop.trf.xlu0
        %v1920 = vpop.trf.xlu0
        %v1921 = vpop.trf.xlu0
        %v1922 = vpop.trf.xlu0
        %v1923 = vpop.trf.xlu0
        %v1924 = vpop.trf.xlu0
        %v1925 = vpop.trf.xlu0
        %v1926 = vpop.trf.xlu0
        %v1927 = vpop.trf.xlu0
        %v1928 = vpop.trf.xlu0
        %v1929 = vpop.trf.xlu0
        %v1930 = vpop.trf.xlu0
        %v1931 = vpop.trf.xlu0
        %v1932 = vpop.trf.xlu0
        %v1933 = vpop.trf.xlu0
        %v1934 = vpop.trf.xlu0
        %v1935 = vrot.slane %v1759, 4
        %v1936 = vsel %vm350, %v1935, %v1695
        %v1938 = vunpack.c.l.s4 1983009808
        %v1939 = vunpack.c.0.s8 %v1938
        %v1940 = vperm.slane %v1936, %v1939
        %v1941 = vrot.slane %v1791, 4
        %v1942 = vsel %vm350, %v1941, %v1727
        %v1944 = vunpack.c.l.s4 1983009808
        %v1945 = vunpack.c.0.s8 %v1944
        %v1946 = vperm.slane %v1942, %v1945
        %v1947 = vrot.slane %v1887, 4
        %v1948 = vsel %vm350, %v1947, %v1823
        %v1950 = vunpack.c.l.s4 1983009808
        %v1951 = vunpack.c.0.s8 %v1950
        %v1952 = vperm.slane %v1948, %v1951
        %v1953 = vrot.slane %v1919, 4
        %v1954 = vsel %vm350, %v1953, %v1855
        %v1956 = vunpack.c.l.s4 1983009808
        %v1957 = vunpack.c.0.s8 %v1956
        %v1958 = vperm.slane %v1954, %v1957
        %v1959 = vrot.slane %v1946, 4
        %v1960 = vsel %vm350, %v1959, %v1940
        %v1962 = vunpack.c.l.s4 1934713408
        %v1963 = vunpack.c.0.s8 %v1962
        %v1964 = vperm.slane %v1960, %v1963
        %v1965 = vrot.slane %v1958, 4
        %v1966 = vsel %vm350, %v1965, %v1952
        %v1968 = vunpack.c.l.s4 1934713408
        %v1969 = vunpack.c.0.s8 %v1968
        %v1970 = vperm.slane %v1966, %v1969
        %v1971 = vrot.slane %v1970, 4
        %v1972 = vsel %vm350, %v1971, %v1964
        %v1973 = vrot.slane %v1964, 4
        %v1974 = vsel %vm350, %v1970, %v1973
        %v1975 = vld [vmem:[%s265] sm:$0xff]
        %v1976 = vadd.f32 %v1972, %v1975
        %v1977 = vadd.f32 %v1974, %v1975
        %vm1978 = vcmask 97280
        %1979 = vst.msk [vmem:[%s253] sm:$0xff] %vm1978, %v1976
        %1980 = vst.msk [vmem:[%s253 + $0x8] sm:$0xff] %vm1978, %v1977
        %s1981 = sand.u32 %s116, 1
        %s1982 = sand.u32 %s116, 1
        %s1983 = smul.addr %s1982, 16
        %s1984 = scalar_lea.vmem [#allocation3], %s1983
        // Predicated region
        $region71: #{tpu_custom_call.1} parent=65 // pred_check
          %p1985 = pneg %p126
        $region72: #{tpu_custom_call.1} parent=65 // pred_check_branch
          %1987 = sbr.rel (%p1985) target = $region74
        $region73: #{tpu_custom_call.1} parent=65 // pred_region
          %s1988 = smul.u32 2, %s18
          %s1989 = smul.addr %s1988, 2
          %s1990 = sadd.s32 %s19, %s1989
          %s1991 = smul.addr %s1990, 8
          %s1992 = scalar_lea.vmem %s3, %s1991
          // Predicated region
          $region75: #{tpu_custom_call.1} parent=73 // pred_check
            _
          $region76: #{tpu_custom_call.1} parent=73 // pred_check_branch
            %1994 = sbr.rel (0) target = $region78
          $region77: #{tpu_custom_call.1} parent=73 // pred_region
            // Predicated region
            $region79: #{tpu_custom_call.1} parent=77 // pred_check
              _
            $region80: #{tpu_custom_call.1} parent=77 // pred_check_branch
              %1996 = sbr.rel (0) target = $region82
            $region81: #{tpu_custom_call.1} parent=77 // pred_region
              // Predicated region
              $region94: #{tpu_custom_call.1} parent=81 // pred_check
                _
              $region95: #{tpu_custom_call.1} parent=81 // pred_check_branch
                %2014 = sbr.rel (0) target = $region97
              $region96: #{tpu_custom_call.1} parent=81 // pred_region
                loop: start=0, step=1, limit=1
                $region98: #{tpu_custom_call.1} parent=96 // loop_pre_header
                  _
                $region99: #{tpu_custom_call.1} parent=96 // loop_header
                  %s2016 = sphi 0, %s2020
                  %p2017 = scmp.ge.s32.totalorder %s2016, 1
                  %s2021 = sphi %s1984, %s1984
                  %s2022 = sphi %s1992, %s1992
                $region100: #{tpu_custom_call.1} parent=96 // loop_header_branch
                  %2019 = sbr.rel (%p2017) target = $region104
                $region101: #{tpu_custom_call.1} parent=96 // loop_body
                  %v2023 = vld [vmem:[%s2021] sm:$0xff]
                  %2024 = vst [vmem:[%s2022] sm:$0xff] %v2023
                  %v2025 = vld [vmem:[%s2021 + $0x8] sm:$0xff]
                  %2026 = vst [vmem:[%s2022 + $0x10] sm:$0xff] %v2025
                $region102: #{tpu_custom_call.1} parent=96 // loop_footer
                  %s2020 = sadd.s32 1, %s2016
                $region103: #{tpu_custom_call.1} parent=96 // loop_footer_branch
                  %2015 = sbr.rel target = $region99
                $region104: #{tpu_custom_call.1} parent=96 // loop_exit
                  _
              $region97: #{tpu_custom_call.1} parent=81 // pred_fallthru
                _
              // Predicated region
              $region105: #{tpu_custom_call.1} parent=81 // pred_check
                _
              $region106: #{tpu_custom_call.1} parent=81 // pred_check_branch
                %2028 = sbr.rel target = $region108
              $region107: #{tpu_custom_call.1} parent=81 // pred_region
                _
              $region108: #{tpu_custom_call.1} parent=81 // pred_fallthru
                _
            $region82: #{tpu_custom_call.1} parent=77 // pred_fallthru
              _
            // Predicated region
            $region83: #{tpu_custom_call.1} parent=77 // pred_check
              _
            $region84: #{tpu_custom_call.1} parent=77 // pred_check_branch
              %1998 = sbr.rel target = $region86
            $region85: #{tpu_custom_call.1} parent=77 // pred_region
              %s2000 = ssub.s32 256, 1
              loop: start=0, step=1, limit=1
              $region87: #{tpu_custom_call.1} parent=85 // loop_pre_header
                _
              $region88: #{tpu_custom_call.1} parent=85 // loop_header
                %s2002 = sphi 0, %s2006
                %p2003 = scmp.ge.s32.totalorder %s2002, 1
                %s2007 = sphi %s1984, %s1984
                %s2008 = sphi %s1992, %s1992
              $region89: #{tpu_custom_call.1} parent=85 // loop_header_branch
                %2005 = sbr.rel (%p2003) target = $region93
              $region90: #{tpu_custom_call.1} parent=85 // loop_body
                %v2009 = vld [vmem:[%s2007] sm:%s2000]
                %2010 = vst [vmem:[%s2008] sm:%s2000] %v2009
                %v2011 = vld [vmem:[%s2007 + $0x8] sm:%s2000]
                %2012 = vst [vmem:[%s2008 + $0x10] sm:%s2000] %v2011
              $region91: #{tpu_custom_call.1} parent=85 // loop_footer
                %s2006 = sadd.s32 1, %s2002
              $region92: #{tpu_custom_call.1} parent=85 // loop_footer_branch
                %2001 = sbr.rel target = $region88
              $region93: #{tpu_custom_call.1} parent=85 // loop_exit
                _
            $region86: #{tpu_custom_call.1} parent=77 // pred_fallthru
              _
          $region78: #{tpu_custom_call.1} parent=73 // pred_fallthru
            _
          %2029 = vnop
        $region74: #{tpu_custom_call.1} parent=65 // pred_fallthru
          _
      $region66: #{tpu_custom_call.1} parent=5 // pred_fallthru
        _
      %p2030 = scmp.le.s32.totalorder 2, %s9
      // Predicated region
      $region109: #{tpu_custom_call.1} parent=5 // pred_check
        %p2031 = pneg %p2030
      $region110: #{tpu_custom_call.1} parent=5 // pred_check_branch
        %2033 = sbr.rel (%p2031) target = $region112
      $region111: #{tpu_custom_call.1} parent=5 // pred_region
        %s2034 = ssub.s32 %s9, 2
        // Predicated region
        $region113: #{tpu_custom_call.1} parent=111 // pred_check
          %p2035 = pneg %p132
        $region114: #{tpu_custom_call.1} parent=111 // pred_check_branch
          %2037 = sbr.rel (%p2035) target = $region116
        $region115: #{tpu_custom_call.1} parent=111 // pred_region
          %s2038 = sand.u32 %s117, 1
          %s2039 = sand.u32 %s117, 1
          %s2040 = smul.addr %s2039, 16
          %s2041 = scalar_lea.vmem [#allocation3], %s2040
        $region116: #{tpu_custom_call.1} parent=111 // pred_fallthru
          _
      $region112: #{tpu_custom_call.1} parent=5 // pred_fallthru
        _
    $region6: #{tpu_custom_call.1} parent=1 // loop_footer
      %s13 = sadd.s32 1, %s9
    $region7: #{tpu_custom_call.1} parent=1 // loop_footer_branch
      %8 = sbr.rel target = $region3
    $region8: #{tpu_custom_call.1} parent=1 // loop_exit
      _

</llo_original>
